<compile_context>
chip_gen: v7x
topology: tpu7x:2x2x1
jax: 0.10.0
libtpu: 0.0.40
codegen_flags: <defaults>
</compile_context>

<pallas_src>
import jax
import jax.numpy as jnp
from jax.experimental import pallas as pl
from jax.experimental.pallas import tpu as pltpu

LANE = 128  # TPU lane width; hidden (16) and out_channels (8) pad to this.


def _fused_residual_gcn_kernel(a_ref, x_ref, w1_ref, w2_ref, b_ref, o_ref,
                               xwc_scr, xwl_scr, h_scr, acc):
    """Fused two-layer residual GCN.

    Grid: (phase, row_tile, k_tile); phase 0 = layer 1 (writes h scratch),
    phase 1 = layer 2 (writes output blocks).

    a_ref  : (TM, TK)            A_hat tile (rows = output nodes, cols = k)
    x_ref  : (N_pad, Fin_pad)    node features, resident
    w1_ref : (Fin_pad, 2*LANE)   [W_c1 | W_t1]
    w2_ref : (LANE,   2*LANE)    [W_c2 | W_t2]
    b_ref  : (2, 2*LANE)         row p = [b_conv_p | b_lin_p]
    o_ref  : (TM, LANE)          output row tile (lane-dense, padded)
    xwc_scr: (N_pad, LANE)       conv half:     X@Wc   (phase 0) / h@Wc (phase 1)
    xwl_scr: (N_pad, LANE)       residual half: X@Wl+b (phase 0) / h@Wl+b (phase 1)
    h_scr  : (N_pad, LANE)       hidden activation of layer 1
    acc    : (TM, LANE)          f32 accumulator for A_tile @ (X W_conv) + b_conv
    """
    phase = pl.program_id(0)
    i = pl.program_id(1)
    k = pl.program_id(2)
    nk = pl.num_programs(2)
    tm, tk = a_ref.shape

    first_step = jnp.logical_and(i == 0, k == 0)

    # ---- Phase entry: one fused X-side matmul per layer, split once into the
    #      lane-dense conv / residual scratches (residual bias pre-added). ----
    @pl.when(jnp.logical_and(first_step, phase == 0))
    def _():
        xw = jnp.dot(x_ref[...], w1_ref[...],
                     preferred_element_type=jnp.float32)
        xwc_scr[...] = xw[:, :LANE]
        xwl_scr[...] = xw[:, LANE:] + b_ref[0:1, LANE:]

    @pl.when(jnp.logical_and(first_step, phase == 1))
    def _():
        hw = jnp.dot(h_scr[...], w2_ref[...],
                     preferred_element_type=jnp.float32)
        xwc_scr[...] = hw[:, :LANE]
        xwl_scr[...] = hw[:, LANE:] + b_ref[1:2, LANE:]

    # ---- Accumulator init: fold the conv bias in (once per row tile). ----
    @pl.when(k == 0)
    def _():
        b_both = b_ref[...]
        conv_b = jnp.where(phase == 0, b_both[0:1, :LANE], b_both[1:2, :LANE])
        acc[...] = jnp.broadcast_to(conv_b, acc.shape)

    # ---- K-reduction of the A_hat row tile against the conv scratch. ----
    kk = pl.multiple_of(k * tk, tk)
    acc[...] += jnp.dot(a_ref[...], xwc_scr[pl.ds(kk, tk), :],
                        preferred_element_type=jnp.float32)

    # ---- Finalize: relu + residual add, once per row tile (lane-dense). ----
    @pl.when(k == nk - 1)
    def _():
        rr = pl.multiple_of(i * tm, tm)
        res = jnp.maximum(acc[...], 0.0) + xwl_scr[pl.ds(rr, tm), :]

        @pl.when(phase == 0)
        def _():
            h_scr[pl.ds(rr, tm), :] = res

        @pl.when(phase == 1)
        def _():
            o_ref[...] = res


def _round_up(v, m):
    return (v + m - 1) // m * m


def _pad2d(x, rows, cols):
    out = jnp.zeros((rows, cols), jnp.float32)
    return out.at[:x.shape[0], :x.shape[1]].set(x.astype(jnp.float32))


def _pad1d(b):
    out = jnp.zeros((LANE,), jnp.float32)
    return out.at[:b.shape[0]].set(b.astype(jnp.float32))


def _pick_tile(n_pad, cap):
    t = min(cap, n_pad)
    while n_pad % t:
        t -= LANE
    return t


@jax.jit
def residual_gcn_forward(x, a_hat, params):
    n, fin = x.shape
    fout = params["w_c2"].shape[1]
    assert params["w_c1"].shape[1] <= LANE and fout <= LANE

    n_pad = _round_up(n, LANE)
    fin_pad = _round_up(fin, LANE)

    a_pad = _pad2d(a_hat, n_pad, n_pad)
    x_pad = _pad2d(x, n_pad, fin_pad)

    # Fused weights: [W_conv | W_lin] padded to lane-dense slabs.
    wcat1 = jnp.concatenate([_pad2d(params["w_c1"], fin_pad, LANE),
                             _pad2d(params["w_t1"], fin_pad, LANE)], axis=1)
    wcat2 = jnp.concatenate([_pad2d(params["w_c2"], LANE, LANE),
                             _pad2d(params["w_t2"], LANE, LANE)], axis=1)
    bcat = jnp.stack([
        jnp.concatenate([_pad1d(params["b_c1"]), _pad1d(params["b_t1"])]),
        jnp.concatenate([_pad1d(params["b_c2"]), _pad1d(params["b_t2"])]),
    ], axis=0)                                                   # (2, 2*LANE)

    # Row tile of the output / A_hat, and K tile of the contraction over nodes.
    # (Caps re-derived downward automatically if n_pad is small; lower them for
    # v7x's 64 MiB VMEM on very large graphs.)
    tm = _pick_tile(n_pad, 256)
    tk = _pick_tile(n_pad, 512)
    grid = (2, n_pad // tm, n_pad // tk)

    out_pad = pl.pallas_call(
        _fused_residual_gcn_kernel,
        out_shape=jax.ShapeDtypeStruct((n_pad, LANE), jnp.float32),
        grid_spec=pltpu.PrefetchScalarGridSpec(
            num_scalar_prefetch=0,
            grid=grid,
            in_specs=[
                pl.BlockSpec((tm, tk), lambda p, i, k: (i, k)),           # A_hat
                pl.BlockSpec((n_pad, fin_pad), lambda p, i, k: (0, 0)),   # X
                pl.BlockSpec((fin_pad, 2 * LANE), lambda p, i, k: (0, 0)),
                pl.BlockSpec((LANE, 2 * LANE), lambda p, i, k: (0, 0)),
                pl.BlockSpec((2, 2 * LANE), lambda p, i, k: (0, 0)),
            ],
            # Phase 0 parks on block 0 (never written there, never flushed
            # mid-phase); phase 1 writes each row block exactly once.
            out_specs=pl.BlockSpec((tm, LANE), lambda p, i, k: (p * i, 0)),
            scratch_shapes=[
                pltpu.VMEM((n_pad, LANE), jnp.float32),   # conv scratch X@Wc / h@Wc
                pltpu.VMEM((n_pad, LANE), jnp.float32),   # residual scratch (+bias)
                pltpu.VMEM((n_pad, LANE), jnp.float32),   # hidden h
                pltpu.VMEM((tm, LANE), jnp.float32),      # A@XW accumulator
            ],
        ),
        compiler_params=pltpu.CompilerParams(
            dimension_semantics=("arbitrary", "arbitrary", "arbitrary")),
    )(a_pad, x_pad, wcat1, wcat2, bcat)

    return out_pad[:n, :fout]


def build_normalized_adjacency(edge_index, num_nodes):
    """Dense D^-1/2 (A + I) D^-1/2 matching GCNConv(normalize=True)."""
    src, dst = edge_index[0], edge_index[1]
    # messages flow src -> dst; row = destination node; duplicates scatter-add.
    a = jnp.zeros((num_nodes, num_nodes), jnp.float32).at[dst, src].add(1.0)
    # add_remaining_self_loops(fill_value=1): only nodes without a self loop.
    diag = jnp.diagonal(a)
    a = a + jnp.diag(jnp.where(diag == 0.0, 1.0, 0.0))
    deg = jnp.sum(a, axis=1)
    dinv = jax.lax.rsqrt(jnp.maximum(deg, 1e-12))
    return a * dinv[:, None] * dinv[None, :]


def _reference(x, a_hat, params):
    h = (jnp.maximum(a_hat @ (x @ params["w_c1"]) + params["b_c1"], 0.0)
         + x @ params["w_t1"] + params["b_t1"])
    out = (jnp.maximum(a_hat @ (h @ params["w_c2"]) + params["b_c2"], 0.0)
           + h @ params["w_t2"] + params["b_t2"])
    return out


if __name__ == "__main__":
    # Small deterministic problem (multiple row tiles after padding: 300 -> 384).
    num_nodes = 300
    in_channels = 4
    hidden = 16
    out_channels = 8

    key = jax.random.PRNGKey(0)
    k_x, k1, k2, k3, k4, k5, k6, k7, k8 = jax.random.split(key, 9)

    # Node features [N, in_channels].
    x = jax.random.normal(k_x, (num_nodes, in_channels), jnp.float32)

    # Deterministic bidirectional ring graph: edge_index of shape [2, 2N].
    idx = jnp.arange(num_nodes, dtype=jnp.int32)
    nxt = (idx + 1) % num_nodes
    edge_index = jnp.stack([jnp.concatenate([idx, nxt]),
                            jnp.concatenate([nxt, idx])], axis=0)

    # TODO(synk): edge_index -> A_hat scatter is done densely on the host; a
    # sparse gather/scatter message-passing kernel is not expressed in Pallas.
    a_hat = build_normalized_adjacency(edge_index, num_nodes)

    # Deterministic parameter initialization (synthetic, not a checkpoint).
    def init(k, shape, scale):
        return scale * jax.random.normal(k, shape, jnp.float32)

    params = {
        "w_c1": init(k1, (in_channels, hidden), 0.5),     # GCNConv(in, 16)
        "b_c1": init(k2, (hidden,), 0.1),
        "w_c2": init(k3, (hidden, out_channels), 0.5),    # GCNConv(16, out)
        "b_c2": init(k4, (out_channels,), 0.1),
        "w_t1": init(k5, (in_channels, hidden), 0.5),     # Linear(in, 16)
        "b_t1": init(k6, (hidden,), 0.1),
        "w_t2": init(k7, (hidden, out_channels), 0.5),    # Linear(16, out)
        "b_t2": init(k8, (out_channels,), 0.1),
    }

    out = residual_gcn_forward(x, a_hat, params)
    out = jax.block_until_ready(out)

    ref = _reference(x, a_hat, params)
    assert out.shape == (num_nodes, out_channels)
    assert jnp.allclose(out, ref, atol=1e-4, rtol=1e-4), "mismatch vs reference"

    print("KERNEL_OK")
</pallas_src>

<mosaic_0001>
module attributes {stable_mosaic.version = 11 : i64} {
  func.func @_fused_residual_gcn_kernel(%arg0: i32, %arg1: i32, %arg2: i32, %arg3: memref<128x384xf32, #tpu.memory_space<vmem>>, %arg4: memref<384x128xf32, #tpu.memory_space<vmem>>, %arg5: memref<128x256xf32, #tpu.memory_space<vmem>>, %arg6: memref<128x256xf32, #tpu.memory_space<vmem>>, %arg7: memref<2x256xf32, #tpu.memory_space<vmem>>, %arg8: memref<128x128xf32, #tpu.memory_space<vmem>>, %arg9: memref<384x128xf32, #tpu.memory_space<vmem>>, %arg10: memref<384x128xf32, #tpu.memory_space<vmem>>, %arg11: memref<384x128xf32, #tpu.memory_space<vmem>>, %arg12: memref<128x128xf32, #tpu.memory_space<vmem>>) attributes {dimension_semantics = [#tpu.dimension_semantics<arbitrary>, #tpu.dimension_semantics<arbitrary>, #tpu.dimension_semantics<arbitrary>], iteration_bounds = array<i64: 2, 3, 1>, scalar_prefetch = 0 : i64, scratch_operands = 4 : i64, tpu.core_type = #tpu.core_type<tc>, window_params = [{transform_indices = @transform_0, window_bounds = array<i64: 128, 384>}, {pipeline_mode = #tpu.pipeline_mode<synchronous>, transform_indices = @transform_1, window_bounds = array<i64: 384, 128>}, {pipeline_mode = #tpu.pipeline_mode<synchronous>, transform_indices = @transform_2, window_bounds = array<i64: 128, 256>}, {pipeline_mode = #tpu.pipeline_mode<synchronous>, transform_indices = @transform_3, window_bounds = array<i64: 128, 256>}, {pipeline_mode = #tpu.pipeline_mode<synchronous>, transform_indices = @transform_4, window_bounds = array<i64: 2, 256>}, {transform_indices = @transform_5, window_bounds = array<i64: 128, 128>}]} {
    %c0_i32 = arith.constant 0 : i32
    %0 = arith.cmpi eq, %arg1, %c0_i32 : i32
    %c0_i32_0 = arith.constant 0 : i32
    %1 = arith.cmpi eq, %arg2, %c0_i32_0 : i32
    %2 = arith.andi %0, %1 : i1
    %c0_i32_1 = arith.constant 0 : i32
    %3 = arith.cmpi eq, %arg0, %c0_i32_1 : i32
    %4 = arith.andi %2, %3 : i1
    %5 = arith.extui %4 : i1 to i32
    %c0_i32_2 = arith.constant 0 : i32
    %6 = arith.cmpi ne, %5, %c0_i32_2 : i32
    scf.if %6 {
      %c0_14 = arith.constant 0 : index
      %c0_15 = arith.constant 0 : index
      %26 = vector.load %arg4[%c0_14, %c0_15] : memref<384x128xf32, #tpu.memory_space<vmem>>, vector<384x128xf32>
      %c0_16 = arith.constant 0 : index
      %c0_17 = arith.constant 0 : index
      %27 = vector.load %arg5[%c0_16, %c0_17] : memref<128x256xf32, #tpu.memory_space<vmem>>, vector<128x256xf32>
      %cst_18 = arith.constant dense<0.000000e+00> : vector<384x256xf32>
      %28 = tpu.matmul %26, %27, %cst_18 {dimension_numbers = #tpu.dot_dimension_numbers<[1], [0], [0], [1], [0, 0, 1, 1], [], []>} : vector<384x128xf32>, vector<128x256xf32>, vector<384x256xf32> -> vector<384x256xf32>
      %29 = vector.extract_strided_slice %28 {offsets = [0, 0], sizes = [384, 128], strides = [1, 1]} : vector<384x256xf32> to vector<384x128xf32>
      %c0_19 = arith.constant 0 : index
      %c0_20 = arith.constant 0 : index
      %30 = vector.load %arg9[%c0_19, %c0_20] : memref<384x128xf32, #tpu.memory_space<vmem>>, vector<384x128xf32>
      tpu.vector_store %arg9[%c0_19, %c0_20], %29 {strides = array<i32>} : memref<384x128xf32, #tpu.memory_space<vmem>>, vector<384x128xf32>,
      %31 = vector.extract_strided_slice %28 {offsets = [0, 128], sizes = [384, 128], strides = [1, 1]} : vector<384x256xf32> to vector<384x128xf32>
      %c0_21 = arith.constant 0 : index
      %c128 = arith.constant 128 : index
      %32 = vector.load %arg7[%c0_21, %c128] : memref<2x256xf32, #tpu.memory_space<vmem>>, vector<1x128xf32>
      %33 = vector.broadcast %32 : vector<1x128xf32> to vector<384x128xf32>
      %34 = arith.addf %31, %33 : vector<384x128xf32>
      %c0_22 = arith.constant 0 : index
      %c0_23 = arith.constant 0 : index
      %35 = vector.load %arg10[%c0_22, %c0_23] : memref<384x128xf32, #tpu.memory_space<vmem>>, vector<384x128xf32>
      tpu.vector_store %arg10[%c0_22, %c0_23], %34 {strides = array<i32>} : memref<384x128xf32, #tpu.memory_space<vmem>>, vector<384x128xf32>,
    } else {
    }
    %c1_i32 = arith.constant 1 : i32
    %7 = arith.cmpi eq, %arg0, %c1_i32 : i32
    %8 = arith.andi %2, %7 : i1
    %9 = arith.extui %8 : i1 to i32
    %c0_i32_3 = arith.constant 0 : i32
    %10 = arith.cmpi ne, %9, %c0_i32_3 : i32
    scf.if %10 {
      %c0_14 = arith.constant 0 : index
      %c0_15 = arith.constant 0 : index
      %26 = vector.load %arg11[%c0_14, %c0_15] : memref<384x128xf32, #tpu.memory_space<vmem>>, vector<384x128xf32>
      %c0_16 = arith.constant 0 : index
      %c0_17 = arith.constant 0 : index
      %27 = vector.load %arg6[%c0_16, %c0_17] : memref<128x256xf32, #tpu.memory_space<vmem>>, vector<128x256xf32>
      %cst_18 = arith.constant dense<0.000000e+00> : vector<384x256xf32>
      %28 = tpu.matmul %26, %27, %cst_18 {dimension_numbers = #tpu.dot_dimension_numbers<[1], [0], [0], [1], [0, 0, 1, 1], [], []>} : vector<384x128xf32>, vector<128x256xf32>, vector<384x256xf32> -> vector<384x256xf32>
      %29 = vector.extract_strided_slice %28 {offsets = [0, 0], sizes = [384, 128], strides = [1, 1]} : vector<384x256xf32> to vector<384x128xf32>
      %c0_19 = arith.constant 0 : index
      %c0_20 = arith.constant 0 : index
      %30 = vector.load %arg9[%c0_19, %c0_20] : memref<384x128xf32, #tpu.memory_space<vmem>>, vector<384x128xf32>
      tpu.vector_store %arg9[%c0_19, %c0_20], %29 {strides = array<i32>} : memref<384x128xf32, #tpu.memory_space<vmem>>, vector<384x128xf32>,
      %31 = vector.extract_strided_slice %28 {offsets = [0, 128], sizes = [384, 128], strides = [1, 1]} : vector<384x256xf32> to vector<384x128xf32>
      %c1 = arith.constant 1 : index
      %c128 = arith.constant 128 : index
      %32 = vector.load %arg7[%c1, %c128] : memref<2x256xf32, #tpu.memory_space<vmem>>, vector<1x128xf32>
      %33 = vector.broadcast %32 : vector<1x128xf32> to vector<384x128xf32>
      %34 = arith.addf %31, %33 : vector<384x128xf32>
      %c0_21 = arith.constant 0 : index
      %c0_22 = arith.constant 0 : index
      %35 = vector.load %arg10[%c0_21, %c0_22] : memref<384x128xf32, #tpu.memory_space<vmem>>, vector<384x128xf32>
      tpu.vector_store %arg10[%c0_21, %c0_22], %34 {strides = array<i32>} : memref<384x128xf32, #tpu.memory_space<vmem>>, vector<384x128xf32>,
    } else {
    }
    %c0_i32_4 = arith.constant 0 : i32
    %11 = arith.cmpi eq, %arg2, %c0_i32_4 : i32
    %12 = arith.extui %11 : i1 to i32
    %c0_i32_5 = arith.constant 0 : i32
    %13 = arith.cmpi ne, %12, %c0_i32_5 : i32
    scf.if %13 {
      %c0_14 = arith.constant 0 : index
      %c0_15 = arith.constant 0 : index
      %26 = vector.load %arg7[%c0_14, %c0_15] : memref<2x256xf32, #tpu.memory_space<vmem>>, vector<2x256xf32>
      %c0_i32_16 = arith.constant 0 : i32
      %27 = arith.cmpi eq, %arg0, %c0_i32_16 : i32
      %28 = vector.extract_strided_slice %26 {offsets = [0, 0], sizes = [1, 128], strides = [1, 1]} : vector<2x256xf32> to vector<1x128xf32>
      %29 = vector.extract_strided_slice %26 {offsets = [1, 0], sizes = [1, 128], strides = [1, 1]} : vector<2x256xf32> to vector<1x128xf32>
      %30 = arith.select %27, %28, %29 : vector<1x128xf32>
      %31 = vector.shape_cast %30 : vector<1x128xf32> to vector<1x128xf32>
      %32 = vector.broadcast %31 : vector<1x128xf32> to vector<128x128xf32>
      %c0_17 = arith.constant 0 : index
      %c0_18 = arith.constant 0 : index
      %33 = vector.load %arg12[%c0_17, %c0_18] : memref<128x128xf32, #tpu.memory_space<vmem>>, vector<128x128xf32>
      tpu.vector_store %arg12[%c0_17, %c0_18], %32 {strides = array<i32>} : memref<128x128xf32, #tpu.memory_space<vmem>>, vector<128x128xf32>,
    } else {
    }
    %c384_i32 = arith.constant 384 : i32
    %14 = arith.muli %arg2, %c384_i32 : i32
    %15 = tpu.assume_multiple %14, 384 : i32
    %c0 = arith.constant 0 : index
    %c0_6 = arith.constant 0 : index
    %16 = vector.load %arg12[%c0, %c0_6] : memref<128x128xf32, #tpu.memory_space<vmem>>, vector<128x128xf32>
    %c0_7 = arith.constant 0 : index
    %c0_8 = arith.constant 0 : index
    %17 = vector.load %arg3[%c0_7, %c0_8] : memref<128x384xf32, #tpu.memory_space<vmem>>, vector<128x384xf32>
    %18 = arith.index_cast %15 : i32 to index
    %c0_9 = arith.constant 0 : index
    %19 = vector.load %arg9[%18, %c0_9] : memref<384x128xf32, #tpu.memory_space<vmem>>, vector<384x128xf32>
    %cst = arith.constant dense<0.000000e+00> : vector<128x128xf32>
    %20 = tpu.matmul %17, %19, %cst {dimension_numbers = #tpu.dot_dimension_numbers<[1], [0], [0], [1], [0, 0, 1, 1], [], []>} : vector<128x384xf32>, vector<384x128xf32>, vector<128x128xf32> -> vector<128x128xf32>
    %21 = arith.addf %16, %20 : vector<128x128xf32>
    %c0_10 = arith.constant 0 : index
    %c0_11 = arith.constant 0 : index
    %22 = vector.load %arg12[%c0_10, %c0_11] : memref<128x128xf32, #tpu.memory_space<vmem>>, vector<128x128xf32>
    tpu.vector_store %arg12[%c0_10, %c0_11], %21 {strides = array<i32>} : memref<128x128xf32, #tpu.memory_space<vmem>>, vector<128x128xf32>,
    %c0_i32_12 = arith.constant 0 : i32
    %23 = arith.cmpi eq, %arg2, %c0_i32_12 : i32
    %24 = arith.extui %23 : i1 to i32
    %c0_i32_13 = arith.constant 0 : i32
    %25 = arith.cmpi ne, %24, %c0_i32_13 : i32
    scf.if %25 {
      %c128_i32 = arith.constant 128 : i32
      %26 = arith.muli %arg1, %c128_i32 : i32
      %27 = tpu.assume_multiple %26, 128 : i32
      %c0_14 = arith.constant 0 : index
      %c0_15 = arith.constant 0 : index
      %28 = vector.load %arg12[%c0_14, %c0_15] : memref<128x128xf32, #tpu.memory_space<vmem>>, vector<128x128xf32>
      %cst_16 = arith.constant 0.000000e+00 : f32
      %29 = vector.broadcast %cst_16 : f32 to vector<128x128xf32>
      %30 = arith.maximumf %28, %29 : vector<128x128xf32>
      %31 = arith.index_cast %27 : i32 to index
      %c0_17 = arith.constant 0 : index
      %32 = vector.load %arg10[%31, %c0_17] : memref<384x128xf32, #tpu.memory_space<vmem>>, vector<128x128xf32>
      %33 = arith.addf %30, %32 : vector<128x128xf32>
      %c0_i32_18 = arith.constant 0 : i32
      %34 = arith.cmpi eq, %arg0, %c0_i32_18 : i32
      %35 = arith.extui %34 : i1 to i32
      %c0_i32_19 = arith.constant 0 : i32
      %36 = arith.cmpi ne, %35, %c0_i32_19 : i32
      scf.if %36 {
        %40 = arith.index_cast %27 : i32 to index
        %c0_22 = arith.constant 0 : index
        %41 = vector.load %arg11[%40, %c0_22] : memref<384x128xf32, #tpu.memory_space<vmem>>, vector<128x128xf32>
        tpu.vector_store %arg11[%40, %c0_22], %33 {strides = array<i32>} : memref<384x128xf32, #tpu.memory_space<vmem>>, vector<128x128xf32>,
      } else {
      }
      %c1_i32_20 = arith.constant 1 : i32
      %37 = arith.cmpi eq, %arg0, %c1_i32_20 : i32
      %38 = arith.extui %37 : i1 to i32
      %c0_i32_21 = arith.constant 0 : i32
      %39 = arith.cmpi ne, %38, %c0_i32_21 : i32
      scf.if %39 {
        %c0_22 = arith.constant 0 : index
        %c0_23 = arith.constant 0 : index
        %40 = vector.load %arg8[%c0_22, %c0_23] : memref<128x128xf32, #tpu.memory_space<vmem>>, vector<128x128xf32>
        tpu.vector_store %arg8[%c0_22, %c0_23], %33 {strides = array<i32>} : memref<128x128xf32, #tpu.memory_space<vmem>>, vector<128x128xf32>,
      } else {
      }
    } else {
    }
    return
  }
  func.func @transform_0(%arg0: i32, %arg1: i32, %arg2: i32) -> (i32, i32) {
    %c0_i32 = arith.constant 0 : i32
    return %arg1, %arg2 : i32, i32
  }
  func.func @transform_1(%arg0: i32, %arg1: i32, %arg2: i32) -> (i32, i32) {
    %c0_i32 = arith.constant 0 : i32
    %c0_i32_0 = arith.constant 0 : i32
    %c0_i32_1 = arith.constant 0 : i32
    return %c0_i32, %c0_i32_0 : i32, i32
  }
  func.func @transform_2(%arg0: i32, %arg1: i32, %arg2: i32) -> (i32, i32) {
    %c0_i32 = arith.constant 0 : i32
    %c0_i32_0 = arith.constant 0 : i32
    %c0_i32_1 = arith.constant 0 : i32
    return %c0_i32, %c0_i32_0 : i32, i32
  }
  func.func @transform_3(%arg0: i32, %arg1: i32, %arg2: i32) -> (i32, i32) {
    %c0_i32 = arith.constant 0 : i32
    %c0_i32_0 = arith.constant 0 : i32
    %c0_i32_1 = arith.constant 0 : i32
    return %c0_i32, %c0_i32_0 : i32, i32
  }
  func.func @transform_4(%arg0: i32, %arg1: i32, %arg2: i32) -> (i32, i32) {
    %c0_i32 = arith.constant 0 : i32
    %c0_i32_0 = arith.constant 0 : i32
    %c0_i32_1 = arith.constant 0 : i32
    return %c0_i32, %c0_i32_0 : i32, i32
  }
  func.func @transform_5(%arg0: i32, %arg1: i32, %arg2: i32) -> (i32, i32) {
    %0 = arith.muli %arg0, %arg1 : i32
    %c0_i32 = arith.constant 0 : i32
    %c0_i32_0 = arith.constant 0 : i32
    return %0, %c0_i32 : i32, i32
  }
}

</mosaic_0001>

<llo_original>
// kernel: residual_gcn_forward.1
$region0: #{residual_gcn_forward.1}
  #allocation0 [shape = 'u32[]', space=smem, size = 0x4, offset = 0x4, fixed_abs, tag = 'smem constant byte address 0x4 - core index']
  #allocation1 [shape = 'u32[144,128]{1,0:T(1,128)}', space=vmem, size = 0x12000, scoped, tag = 'internal scratch']
  #allocation2 [shape = 'f32[384,128]{1,0:T(8,128)}', space=vmem, size = 0x30000, scoped, tag = 'scratch operand']
  #allocation3 [shape = 'f32[384,128]{1,0:T(8,128)}', space=vmem, size = 0x30000, scoped, tag = 'scratch operand']
  #allocation4 [shape = 'f32[384,128]{1,0:T(8,128)}', space=vmem, size = 0x30000, scoped, tag = 'scratch operand']
  #allocation5 [shape = 'f32[128,128]{1,0:T(8,128)}', space=vmem, size = 0x10000, scoped, tag = 'scratch operand']
  %s0 = inlined_call_operand.vmem [shape: f32[384,384], index: 0, kind: input, shape index: {}]
  %s1 = inlined_call_operand.vmem [shape: f32[384,128], index: 1, kind: input, shape index: {}]
  %s2 = inlined_call_operand.vmem [shape: f32[128,256], index: 2, kind: input, shape index: {}]
  %s3 = inlined_call_operand.vmem [shape: f32[128,256], index: 3, kind: input, shape index: {}]
  %s4 = inlined_call_operand.vmem [shape: f32[2,256], index: 4, kind: input, shape index: {}]
  %s5 = inlined_call_operand.vmem [shape: f32[384,128], index: 5, kind: output, shape index: {}]
  %s6 = sld [smem:[#allocation0]]
  $region77: #{residual_gcn_forward.1} parent=0
    _
  %s8 = ssub.s32 1, %s6
  %s9 = scalar_select 0, %s8, %s6
  loop: start=0, step=1, limit=8
  $region2: #{residual_gcn_forward.1} parent=0 // loop_pre_header
    _
  $region3: #{residual_gcn_forward.1} parent=0 // loop_header
    %s11 = sphi 0, %s15
    %p12 = scmp.ge.s32.totalorder %s11, 8
    %s18 = sphi 0, %s37
    %s19 = sphi 0, %s33
    %s20 = sphi 0, %s29
    %s21 = sphi 0, %s18
    %s22 = sphi 0, %s19
    %s23 = sphi 0, %s20
    %s24 = sphi 0, %s21
    %s25 = sphi 0, %s22
    %s26 = sphi 0, %s23
    %s42 = sphi 0, %s44
    %s45 = sphi 0, %s42
    %s46 = sphi 0, %s45
    %s62 = sphi 0, %s46
    %s66 = sphi 0, %s66
    %s68 = sphi 0, %s66
    %s69 = sphi 0, %s68
    %s83 = sphi 0, %s69
    %s87 = sphi 0, %s87
    %s89 = sphi 0, %s87
    %s90 = sphi 0, %s89
    %s104 = sphi 0, %s90
    %s108 = sphi 0, %s108
    %s110 = sphi 0, %s108
    %s111 = sphi 0, %s110
    %s125 = sphi 0, %s111
    %s129 = sphi 0, %s129
    %s131 = sphi 0, %s129
    %s132 = sphi 0, %s131
    %s146 = sphi 0, %s132
    %s154 = sphi 0, %s156
    %s157 = sphi 0, %s154
    %s158 = sphi 0, %s157
    %s174 = sphi 0, %s158
  $region4: #{residual_gcn_forward.1} parent=0 // loop_header_branch
    %14 = sbr.rel (%p12) target = $region8
  $region5: #{residual_gcn_forward.1} parent=0 // loop_body
    %s16 = ssub.s32 %s11, 1
    %s17 = ssub.s32 %s11, 2
    %s27 = sadd.s32 1, %s20
    %p28 = scmp.ge.s32.totalorder %s27, 1
    %s29 = scalar_select %p28, 0, %s27
    %s30 = sadd.s32 1, %s19
    %s31 = scalar_select %p28, %s30, %s19
    %p32 = scmp.ge.s32.totalorder %s31, 3
    %s33 = scalar_select %p32, 0, %s31
    %s34 = sadd.s32 1, %s18
    %s35 = scalar_select %p32, %s34, %s18
    %p36 = scmp.ge.s32.totalorder %s35, 2
    %s37 = scalar_select %p36, 0, %s35
    %s38 = ssub.s32 %s19, %s33
    %s39 = ssub.s32 %s20, %s29
    %s40 = sor.u32 %s38, %s39
    %p41 = scmp.eq.s32.totalorder %s40, 0
    %s43 = sadd.s32 %s42, 1
    %s44 = scalar_select %p41, %s42, %s43
    %p47 = pneg %p41
    %p48 = scmp.eq.s32.totalorder %s11, 5
    %p49 = por %p47, %p48
    %p50 = scmp.ne.s32.totalorder %s42, %s45
    %p51 = scmp.eq.s32.totalorder %s11, 0
    %p52 = por %p50, %p51
    %p53 = scmp.ne.s32.totalorder %s42, %s45
    %p54 = scmp.eq.s32.totalorder %s16, 5
    %p55 = por %p53, %p54
    %p56 = scmp.ne.s32.totalorder %s45, %s46
    %p57 = scmp.eq.s32.totalorder %s16, 0
    %p58 = por %p56, %p57
    %p59 = scmp.ne.s32.totalorder %s45, %s46
    %p60 = scmp.eq.s32.totalorder %s17, 5
    %p61 = por %p59, %p60
    %p63 = scmp.ne.s32.totalorder %s46, %s62
    %p64 = scmp.eq.s32.totalorder %s17, 0
    %p65 = por %p63, %p64
    %s67 = sadd.s32 %s66, 1
    %p70 = scmp.eq.s32.totalorder %s11, 5
    %p71 = scmp.ne.s32.totalorder %s66, %s68
    %p72 = scmp.eq.s32.totalorder %s11, 0
    %p73 = por %p71, %p72
    %p74 = scmp.ne.s32.totalorder %s66, %s68
    %p75 = scmp.eq.s32.totalorder %s16, 5
    %p76 = por %p74, %p75
    %p77 = scmp.ne.s32.totalorder %s68, %s69
    %p78 = scmp.eq.s32.totalorder %s16, 0
    %p79 = por %p77, %p78
    %p80 = scmp.ne.s32.totalorder %s68, %s69
    %p81 = scmp.eq.s32.totalorder %s17, 5
    %p82 = por %p80, %p81
    %p84 = scmp.ne.s32.totalorder %s69, %s83
    %p85 = scmp.eq.s32.totalorder %s17, 0
    %p86 = por %p84, %p85
    %s88 = sadd.s32 %s87, 1
    %p91 = scmp.eq.s32.totalorder %s11, 5
    %p92 = scmp.ne.s32.totalorder %s87, %s89
    %p93 = scmp.eq.s32.totalorder %s11, 0
    %p94 = por %p92, %p93
    %p95 = scmp.ne.s32.totalorder %s87, %s89
    %p96 = scmp.eq.s32.totalorder %s16, 5
    %p97 = por %p95, %p96
    %p98 = scmp.ne.s32.totalorder %s89, %s90
    %p99 = scmp.eq.s32.totalorder %s16, 0
    %p100 = por %p98, %p99
    %p101 = scmp.ne.s32.totalorder %s89, %s90
    %p102 = scmp.eq.s32.totalorder %s17, 5
    %p103 = por %p101, %p102
    %p105 = scmp.ne.s32.totalorder %s90, %s104
    %p106 = scmp.eq.s32.totalorder %s17, 0
    %p107 = por %p105, %p106
    %s109 = sadd.s32 %s108, 1
    %p112 = scmp.eq.s32.totalorder %s11, 5
    %p113 = scmp.ne.s32.totalorder %s108, %s110
    %p114 = scmp.eq.s32.totalorder %s11, 0
    %p115 = por %p113, %p114
    %p116 = scmp.ne.s32.totalorder %s108, %s110
    %p117 = scmp.eq.s32.totalorder %s16, 5
    %p118 = por %p116, %p117
    %p119 = scmp.ne.s32.totalorder %s110, %s111
    %p120 = scmp.eq.s32.totalorder %s16, 0
    %p121 = por %p119, %p120
    %p122 = scmp.ne.s32.totalorder %s110, %s111
    %p123 = scmp.eq.s32.totalorder %s17, 5
    %p124 = por %p122, %p123
    %p126 = scmp.ne.s32.totalorder %s111, %s125
    %p127 = scmp.eq.s32.totalorder %s17, 0
    %p128 = por %p126, %p127
    %s130 = sadd.s32 %s129, 1
    %p133 = scmp.eq.s32.totalorder %s11, 5
    %p134 = scmp.ne.s32.totalorder %s129, %s131
    %p135 = scmp.eq.s32.totalorder %s11, 0
    %p136 = por %p134, %p135
    %p137 = scmp.ne.s32.totalorder %s129, %s131
    %p138 = scmp.eq.s32.totalorder %s16, 5
    %p139 = por %p137, %p138
    %p140 = scmp.ne.s32.totalorder %s131, %s132
    %p141 = scmp.eq.s32.totalorder %s16, 0
    %p142 = por %p140, %p141
    %p143 = scmp.ne.s32.totalorder %s131, %s132
    %p144 = scmp.eq.s32.totalorder %s17, 5
    %p145 = por %p143, %p144
    %p147 = scmp.ne.s32.totalorder %s132, %s146
    %p148 = scmp.eq.s32.totalorder %s17, 0
    %p149 = por %p147, %p148
    %s150 = smul.u32 %s18, %s19
    %s151 = smul.u32 %s37, %s33
    %s152 = ssub.s32 %s150, %s151
    %p153 = scmp.eq.s32.totalorder %s152, 0
    %s155 = sadd.s32 %s154, 1
    %s156 = scalar_select %p153, %s154, %s155
    %p159 = pneg %p153
    %p160 = scmp.eq.s32.totalorder %s11, 5
    %p161 = por %p159, %p160
    %p162 = scmp.ne.s32.totalorder %s154, %s157
    %p163 = scmp.eq.s32.totalorder %s11, 0
    %p164 = por %p162, %p163
    %p165 = scmp.ne.s32.totalorder %s154, %s157
    %p166 = scmp.eq.s32.totalorder %s16, 5
    %p167 = por %p165, %p166
    %p168 = scmp.ne.s32.totalorder %s157, %s158
    %p169 = scmp.eq.s32.totalorder %s16, 0
    %p170 = por %p168, %p169
    %p171 = scmp.ne.s32.totalorder %s157, %s158
    %p172 = scmp.eq.s32.totalorder %s17, 5
    %p173 = por %p171, %p172
    %p175 = scmp.ne.s32.totalorder %s158, %s174
    %p176 = scmp.eq.s32.totalorder %s17, 0
    %p177 = por %p175, %p176
    %p178 = scmp.le.s32.totalorder 1, %s11
    %p179 = scmp.lt.s32.totalorder %s11, 7
    %p180 = pnand %p178, %p179
    %p181 = pneg %p180
    // Predicated region
    $region9: #{residual_gcn_forward.1} parent=5 // pred_check
      _
    $region10: #{residual_gcn_forward.1} parent=5 // pred_check_branch
      %183 = sbr.rel (%p180) target = $region12
    $region11: #{residual_gcn_forward.1} parent=5 // pred_region
      %s184 = ssub.s32 %s11, 1
      // Predicated region
      $region13: #{residual_gcn_forward.1} parent=11 // pred_check
        %p185 = pneg %p79
      $region14: #{residual_gcn_forward.1} parent=11 // pred_check_branch
        %187 = sbr.rel (%p185) target = $region16
      $region15: #{residual_gcn_forward.1} parent=11 // pred_region
        _
      $region16: #{residual_gcn_forward.1} parent=11 // pred_fallthru
        _
      // Predicated region
      $region17: #{residual_gcn_forward.1} parent=11 // pred_check
        %p188 = pneg %p100
      $region18: #{residual_gcn_forward.1} parent=11 // pred_check_branch
        %190 = sbr.rel (%p188) target = $region20
      $region19: #{residual_gcn_forward.1} parent=11 // pred_region
        _
      $region20: #{residual_gcn_forward.1} parent=11 // pred_fallthru
        _
      // Predicated region
      $region21: #{residual_gcn_forward.1} parent=11 // pred_check
        %p191 = pneg %p121
      $region22: #{residual_gcn_forward.1} parent=11 // pred_check_branch
        %193 = sbr.rel (%p191) target = $region24
      $region23: #{residual_gcn_forward.1} parent=11 // pred_region
        _
      $region24: #{residual_gcn_forward.1} parent=11 // pred_fallthru
        _
      // Predicated region
      $region25: #{residual_gcn_forward.1} parent=11 // pred_check
        %p194 = pneg %p142
      $region26: #{residual_gcn_forward.1} parent=11 // pred_check_branch
        %196 = sbr.rel (%p194) target = $region28
      $region27: #{residual_gcn_forward.1} parent=11 // pred_region
        _
      $region28: #{residual_gcn_forward.1} parent=11 // pred_fallthru
        _
    $region12: #{residual_gcn_forward.1} parent=5 // pred_fallthru
      _
    %p197 = scmp.lt.s32.totalorder %s11, 6
    // Predicated region
    $region29: #{residual_gcn_forward.1} parent=5 // pred_check
      %p198 = pneg %p197
    $region30: #{residual_gcn_forward.1} parent=5 // pred_check_branch
      %200 = sbr.rel (%p198) target = $region32
    $region31: #{residual_gcn_forward.1} parent=5 // pred_region
      // Predicated region
      $region33: #{residual_gcn_forward.1} parent=31 // pred_check
        %p201 = pneg %p52
      $region34: #{residual_gcn_forward.1} parent=31 // pred_check_branch
        %203 = sbr.rel (%p201) target = $region36
      $region35: #{residual_gcn_forward.1} parent=31 // pred_region
        %s204 = smul.u32 16, %s19
        %s205 = smul.u32 3, %s20
        %p206 = scmp.lt.s32.totalorder %s204, 47
        %s207 = scalar_select %p206, %s204, 47
        %p208 = scmp.lt.s32.totalorder %s205, 2
        %s209 = scalar_select %p208, %s205, 2
        %s210 = smul.addr %s207, 3
        %s211 = sadd.s32 %s209, %s210
        %s212 = smul.addr %s211, 8
        %s213 = scalar_lea.vmem %s0, %s212
        %s214 = smul.u32 16, %s19
        %s215 = smul.u32 3, %s20
      $region36: #{residual_gcn_forward.1} parent=31 // pred_fallthru
        _
    $region32: #{residual_gcn_forward.1} parent=5 // pred_fallthru
      _
    %p216 = scmp.le.s32.totalorder 1, %s11
    %p217 = scmp.lt.s32.totalorder %s11, 7
    %p218 = pnand %p216, %p217
    %p219 = pneg %p218
    // Predicated region
    $region37: #{residual_gcn_forward.1} parent=5 // pred_check
      _
    $region38: #{residual_gcn_forward.1} parent=5 // pred_check_branch
      %221 = sbr.rel (%p218) target = $region40
    $region39: #{residual_gcn_forward.1} parent=5 // pred_region
      %s222 = ssub.s32 %s11, 1
      %s223 = smul.u32 16, %s22
      %s224 = smul.u32 3, %s23
      %p225 = scmp.lt.s32.totalorder %s223, 47
      %s226 = scalar_select %p225, %s223, 47
      %p227 = scmp.lt.s32.totalorder %s224, 2
      %s228 = scalar_select %p227, %s224, 2
      %s229 = smul.addr %s226, 3
      %s230 = sadd.s32 %s228, %s229
      %s231 = smul.addr %s230, 8
      %s232 = scalar_lea.vmem %s0, %s231
      %p233 = pneg %p58
      %p234 = pneg %p55
      %p235 = pneg %p79
      %p236 = pneg %p76
      %p237 = pneg %p100
      %p238 = pneg %p97
      %p239 = pneg %p121
      %p240 = pneg %p118
      %p241 = pneg %p142
      %p242 = pneg %p139
      %p243 = pneg %p170
      %p244 = pneg %p167
      %s245 = smul.u32 %s21, %s22
      %s246 = smul.u32 16, %s245
      %p247 = scmp.lt.s32.totalorder %s246, 47
      %s248 = scalar_select %p247, %s246, 47
      %s249 = smul.addr %s248, 8
      %s250 = scalar_lea.vmem %s5, %s249
      %s251 = smul.u32 16, %s22
      %s252 = smul.u32 3, %s23
      %p253 = scmp.lt.s32.totalorder %s251, 47
      %s254 = scalar_select %p253, %s251, 47
      %p255 = scmp.lt.s32.totalorder %s252, 2
      %s256 = scalar_select %p255, %s252, 2
      %s257 = smul.addr %s254, 3
      %s258 = sadd.s32 %s256, %s257
      %s259 = smul.addr %s258, 8
      %s260 = scalar_lea.vmem %s0, %s259
      %s261 = smul.u32 16, %s22
      %s262 = smul.u32 3, %s23
      %s263 = smul.u32 %s21, %s22
      %s264 = smul.u32 16, %s263
      %p265 = scmp.lt.s32.totalorder %s264, 47
      %s266 = scalar_select %p265, %s264, 47
      %s267 = smul.addr %s266, 8
      %s268 = scalar_lea.vmem %s5, %s267
      %s269 = smul.u32 %s21, %s22
      %s270 = smul.u32 16, %s269
      %p271 = scmp.eq.s32.totalorder %s22, 0
      %p272 = scmp.eq.s32.totalorder %s23, 0
      %p273 = pnand %p271, %p272
      %p274 = pneg %p273
      %p275 = scmp.eq.s32.totalorder %s21, 0
      %p276 = pnand %p274, %p275
      %p277 = pneg %p276
      // Predicated region
      $region41: #{residual_gcn_forward.1} parent=39 // pred_check
        _
      $region42: #{residual_gcn_forward.1} parent=39 // pred_check_branch
        %279 = sbr.rel (%p276) target = $region44
      $region43: #{residual_gcn_forward.1} parent=39 // pred_region
        %v280 = vld [vmem:[%s1] sm:$0xff]
        %v281 = vld [vmem:[%s1 + $0x8] sm:$0xff]
        %v282 = vld [vmem:[%s1 + $0x10] sm:$0xff]
        %v283 = vld [vmem:[%s1 + $0x18] sm:$0xff]
        %v284 = vld [vmem:[%s1 + $0x20] sm:$0xff]
        %v285 = vld [vmem:[%s1 + $0x28] sm:$0xff]
        %v286 = vld [vmem:[%s1 + $0x30] sm:$0xff]
        %v287 = vld [vmem:[%s1 + $0x38] sm:$0xff]
        %v288 = vld [vmem:[%s1 + $0x40] sm:$0xff]
        %v289 = vld [vmem:[%s1 + $0x48] sm:$0xff]
        %v290 = vld [vmem:[%s1 + $0x50] sm:$0xff]
        %v291 = vld [vmem:[%s1 + $0x58] sm:$0xff]
        %v292 = vld [vmem:[%s1 + $0x60] sm:$0xff]
        %v293 = vld [vmem:[%s1 + $0x68] sm:$0xff]
        %v294 = vld [vmem:[%s1 + $0x70] sm:$0xff]
        %v295 = vld [vmem:[%s1 + $0x78] sm:$0xff]
        %v296 = vld [vmem:[%s1 + $0x80] sm:$0xff]
        %v297 = vld [vmem:[%s1 + $0x88] sm:$0xff]
        %v298 = vld [vmem:[%s1 + $0x90] sm:$0xff]
        %v299 = vld [vmem:[%s1 + $0x98] sm:$0xff]
        %v300 = vld [vmem:[%s1 + $0xa0] sm:$0xff]
        %v301 = vld [vmem:[%s1 + $0xa8] sm:$0xff]
        %v302 = vld [vmem:[%s1 + $0xb0] sm:$0xff]
        %v303 = vld [vmem:[%s1 + $0xb8] sm:$0xff]
        %v304 = vld [vmem:[%s1 + $0xc0] sm:$0xff]
        %v305 = vld [vmem:[%s1 + $0xc8] sm:$0xff]
        %v306 = vld [vmem:[%s1 + $0xd0] sm:$0xff]
        %v307 = vld [vmem:[%s1 + $0xd8] sm:$0xff]
        %v308 = vld [vmem:[%s1 + $0xe0] sm:$0xff]
        %v309 = vld [vmem:[%s1 + $0xe8] sm:$0xff]
        %v310 = vld [vmem:[%s1 + $0xf0] sm:$0xff]
        %v311 = vld [vmem:[%s1 + $0xf8] sm:$0xff]
        %v312 = vld [vmem:[%s1 + $0x100] sm:$0xff]
        %v313 = vld [vmem:[%s1 + $0x108] sm:$0xff]
        %v314 = vld [vmem:[%s1 + $0x110] sm:$0xff]
        %v315 = vld [vmem:[%s1 + $0x118] sm:$0xff]
        %v316 = vld [vmem:[%s1 + $0x120] sm:$0xff]
        %v317 = vld [vmem:[%s1 + $0x128] sm:$0xff]
        %v318 = vld [vmem:[%s1 + $0x130] sm:$0xff]
        %v319 = vld [vmem:[%s1 + $0x138] sm:$0xff]
        %v320 = vld [vmem:[%s1 + $0x140] sm:$0xff]
        %v321 = vld [vmem:[%s1 + $0x148] sm:$0xff]
        %v322 = vld [vmem:[%s1 + $0x150] sm:$0xff]
        %v323 = vld [vmem:[%s1 + $0x158] sm:$0xff]
        %v324 = vld [vmem:[%s1 + $0x160] sm:$0xff]
        %v325 = vld [vmem:[%s1 + $0x168] sm:$0xff]
        %v326 = vld [vmem:[%s1 + $0x170] sm:$0xff]
        %v327 = vld [vmem:[%s1 + $0x178] sm:$0xff]
        %v328 = vld [vmem:[%s2] sm:$0xff]
        %v329 = vld [vmem:[%s2 + $0x8] sm:$0xff]
        %v330 = vld [vmem:[%s2 + $0x10] sm:$0xff]
        %v331 = vld [vmem:[%s2 + $0x18] sm:$0xff]
        %v332 = vld [vmem:[%s2 + $0x20] sm:$0xff]
        %v333 = vld [vmem:[%s2 + $0x28] sm:$0xff]
        %v334 = vld [vmem:[%s2 + $0x30] sm:$0xff]
        %v335 = vld [vmem:[%s2 + $0x38] sm:$0xff]
        %v336 = vld [vmem:[%s2 + $0x40] sm:$0xff]
        %v337 = vld [vmem:[%s2 + $0x48] sm:$0xff]
        %v338 = vld [vmem:[%s2 + $0x50] sm:$0xff]
        %v339 = vld [vmem:[%s2 + $0x58] sm:$0xff]
        %v340 = vld [vmem:[%s2 + $0x60] sm:$0xff]
        %v341 = vld [vmem:[%s2 + $0x68] sm:$0xff]
        %v342 = vld [vmem:[%s2 + $0x70] sm:$0xff]
        %v343 = vld [vmem:[%s2 + $0x78] sm:$0xff]
        %v344 = vld [vmem:[%s2 + $0x80] sm:$0xff]
        %v345 = vld [vmem:[%s2 + $0x88] sm:$0xff]
        %v346 = vld [vmem:[%s2 + $0x90] sm:$0xff]
        %v347 = vld [vmem:[%s2 + $0x98] sm:$0xff]
        %v348 = vld [vmem:[%s2 + $0xa0] sm:$0xff]
        %v349 = vld [vmem:[%s2 + $0xa8] sm:$0xff]
        %v350 = vld [vmem:[%s2 + $0xb0] sm:$0xff]
        %v351 = vld [vmem:[%s2 + $0xb8] sm:$0xff]
        %v352 = vld [vmem:[%s2 + $0xc0] sm:$0xff]
        %v353 = vld [vmem:[%s2 + $0xc8] sm:$0xff]
        %v354 = vld [vmem:[%s2 + $0xd0] sm:$0xff]
        %v355 = vld [vmem:[%s2 + $0xd8] sm:$0xff]
        %v356 = vld [vmem:[%s2 + $0xe0] sm:$0xff]
        %v357 = vld [vmem:[%s2 + $0xe8] sm:$0xff]
        %v358 = vld [vmem:[%s2 + $0xf0] sm:$0xff]
        %v359 = vld [vmem:[%s2 + $0xf8] sm:$0xff]
        %360 = vmatprep.subr.mxu0 %v329
        %361 = vmatpush1.msra.mxu0 %v328
        %362 = vmatprep.subr.mxu0 %v331
        %363 = vmatpush1.msra.mxu0 %v330
        %364 = vmatprep.subr.mxu0 %v333
        %365 = vmatpush1.msra.mxu0 %v332
        %366 = vmatprep.subr.mxu0 %v335
        %367 = vmatpush1.msra.mxu0 %v334
        %368 = vmatprep.subr.mxu0 %v337
        %369 = vmatpush1.msra.mxu0 %v336
        %370 = vmatprep.subr.mxu0 %v339
        %371 = vmatpush1.msra.mxu0 %v338
        %372 = vmatprep.subr.mxu0 %v341
        %373 = vmatpush1.msra.mxu0 %v340
        %374 = vmatprep.subr.mxu0 %v343
        %375 = vmatpush1.msra.mxu0 %v342
        %376 = vmatprep.subr.mxu0 %v345
        %377 = vmatpush1.msra.mxu0 %v344
        %378 = vmatprep.subr.mxu0 %v347
        %379 = vmatpush1.msra.mxu0 %v346
        %380 = vmatprep.subr.mxu0 %v349
        %381 = vmatpush1.msra.mxu0 %v348
        %382 = vmatprep.subr.mxu0 %v351
        %383 = vmatpush1.msra.mxu0 %v350
        %384 = vmatprep.subr.mxu0 %v353
        %385 = vmatpush1.msra.mxu0 %v352
        %386 = vmatprep.subr.mxu0 %v355
        %387 = vmatpush1.msra.mxu0 %v354
        %388 = vmatprep.subr.mxu0 %v357
        %389 = vmatpush1.msra.mxu0 %v356
        %390 = vmatprep.subr.mxu0 %v359
        %391 = vmatpush1.msra.mxu0 %v358
        %392 = vmatprep.subr.mxu0 0.0
        %393 = vmatpush1.msra.mxu0 0.0
        %394 = vmatprep.subr.mxu0 0.0
        %395 = vmatpush1.msra.mxu0 0.0
        %396 = vmatprep.subr.mxu0 0.0
        %397 = vmatpush1.msra.mxu0 0.0
        %398 = vmatprep.subr.mxu0 0.0
        %399 = vmatpush1.msra.mxu0 0.0
        %400 = vmatprep.subr.mxu0 0.0
        %401 = vmatpush1.msra.mxu0 0.0
        %402 = vmatprep.subr.mxu0 0.0
        %403 = vmatpush1.msra.mxu0 0.0
        %404 = vmatprep.subr.mxu0 0.0
        %405 = vmatpush1.msra.mxu0 0.0
        %406 = vmatprep.subr.mxu0 0.0
        %407 = vmatpush1.msra.mxu0 0.0
        %408 = vmatprep.subr.mxu0 0.0
        %409 = vmatpush1.msra.mxu0 0.0
        %410 = vmatprep.subr.mxu0 0.0
        %411 = vmatpush1.msra.mxu0 0.0
        %412 = vmatprep.subr.mxu0 0.0
        %413 = vmatpush1.msra.mxu0 0.0
        %414 = vmatprep.subr.mxu0 0.0
        %415 = vmatpush1.msra.mxu0 0.0
        %416 = vmatprep.subr.mxu0 0.0
        %417 = vmatpush1.msra.mxu0 0.0
        %418 = vmatprep.subr.mxu0 0.0
        %419 = vmatpush1.msra.mxu0 0.0
        %420 = vmatprep.subr.mxu0 0.0
        %421 = vmatpush1.msra.mxu0 0.0
        %422 = vmatprep.subr.mxu0 0.0
        %423 = vmatpush1.msra.mxu0 0.0
        %424 = vmatprep.mubr.f32.mxu0 0.0
        %425 = vmatmul.mubr.f32.gmra.mrb[0].mxu0 %v280
        %v426 = vpop.f32.mrb[0].mxu0
        %v427 = vadd.f32 0.0, %v426
        %v428 = vpop.f32.mrb[0].mxu0
        %v429 = vadd.f32 0.0, %v428
        %430 = vmatprep.mubr.f32.mxu0 0.0
        %431 = vmatmul.mubr.f32.gmra.mrb[0].mxu0 %v281
        %v432 = vpop.f32.mrb[0].mxu0
        %v433 = vadd.f32 0.0, %v432
        %v434 = vpop.f32.mrb[0].mxu0
        %v435 = vadd.f32 0.0, %v434
        %436 = vmatprep.mubr.f32.mxu0 0.0
        %437 = vmatmul.mubr.f32.gmra.mrb[0].mxu0 %v282
        %v438 = vpop.f32.mrb[0].mxu0
        %v439 = vadd.f32 0.0, %v438
        %v440 = vpop.f32.mrb[0].mxu0
        %v441 = vadd.f32 0.0, %v440
        %442 = vmatprep.mubr.f32.mxu0 0.0
        %443 = vmatmul.mubr.f32.gmra.mrb[0].mxu0 %v283
        %v444 = vpop.f32.mrb[0].mxu0
        %v445 = vadd.f32 0.0, %v444
        %v446 = vpop.f32.mrb[0].mxu0
        %v447 = vadd.f32 0.0, %v446
        %448 = vmatprep.mubr.f32.mxu0 0.0
        %449 = vmatmul.mubr.f32.gmra.mrb[0].mxu0 %v284
        %v450 = vpop.f32.mrb[0].mxu0
        %v451 = vadd.f32 0.0, %v450
        %v452 = vpop.f32.mrb[0].mxu0
        %v453 = vadd.f32 0.0, %v452
        %454 = vmatprep.mubr.f32.mxu0 0.0
        %455 = vmatmul.mubr.f32.gmra.mrb[0].mxu0 %v285
        %v456 = vpop.f32.mrb[0].mxu0
        %v457 = vadd.f32 0.0, %v456
        %v458 = vpop.f32.mrb[0].mxu0
        %v459 = vadd.f32 0.0, %v458
        %460 = vmatprep.mubr.f32.mxu0 0.0
        %461 = vmatmul.mubr.f32.gmra.mrb[0].mxu0 %v286
        %v462 = vpop.f32.mrb[0].mxu0
        %v463 = vadd.f32 0.0, %v462
        %v464 = vpop.f32.mrb[0].mxu0
        %v465 = vadd.f32 0.0, %v464
        %466 = vmatprep.mubr.f32.mxu0 0.0
        %467 = vmatmul.mubr.f32.gmra.mrb[0].mxu0 %v287
        %v468 = vpop.f32.mrb[0].mxu0
        %v469 = vadd.f32 0.0, %v468
        %v470 = vpop.f32.mrb[0].mxu0
        %v471 = vadd.f32 0.0, %v470
        %472 = vmatprep.mubr.f32.mxu0 0.0
        %473 = vmatmul.mubr.f32.gmra.mrb[0].mxu0 %v288
        %v474 = vpop.f32.mrb[0].mxu0
        %v475 = vadd.f32 0.0, %v474
        %v476 = vpop.f32.mrb[0].mxu0
        %v477 = vadd.f32 0.0, %v476
        %478 = vmatprep.mubr.f32.mxu0 0.0
        %479 = vmatmul.mubr.f32.gmra.mrb[0].mxu0 %v289
        %v480 = vpop.f32.mrb[0].mxu0
        %v481 = vadd.f32 0.0, %v480
        %v482 = vpop.f32.mrb[0].mxu0
        %v483 = vadd.f32 0.0, %v482
        %484 = vmatprep.mubr.f32.mxu0 0.0
        %485 = vmatmul.mubr.f32.gmra.mrb[0].mxu0 %v290
        %v486 = vpop.f32.mrb[0].mxu0
        %v487 = vadd.f32 0.0, %v486
        %v488 = vpop.f32.mrb[0].mxu0
        %v489 = vadd.f32 0.0, %v488
        %490 = vmatprep.mubr.f32.mxu0 0.0
        %491 = vmatmul.mubr.f32.gmra.mrb[0].mxu0 %v291
        %v492 = vpop.f32.mrb[0].mxu0
        %v493 = vadd.f32 0.0, %v492
        %v494 = vpop.f32.mrb[0].mxu0
        %v495 = vadd.f32 0.0, %v494
        %496 = vmatprep.mubr.f32.mxu0 0.0
        %497 = vmatmul.mubr.f32.gmra.mrb[0].mxu0 %v292
        %v498 = vpop.f32.mrb[0].mxu0
        %v499 = vadd.f32 0.0, %v498
        %v500 = vpop.f32.mrb[0].mxu0
        %v501 = vadd.f32 0.0, %v500
        %502 = vmatprep.mubr.f32.mxu0 0.0
        %503 = vmatmul.mubr.f32.gmra.mrb[0].mxu0 %v293
        %v504 = vpop.f32.mrb[0].mxu0
        %v505 = vadd.f32 0.0, %v504
        %v506 = vpop.f32.mrb[0].mxu0
        %v507 = vadd.f32 0.0, %v506
        %508 = vmatprep.mubr.f32.mxu0 0.0
        %509 = vmatmul.mubr.f32.gmra.mrb[0].mxu0 %v294
        %v510 = vpop.f32.mrb[0].mxu0
        %v511 = vadd.f32 0.0, %v510
        %v512 = vpop.f32.mrb[0].mxu0
        %v513 = vadd.f32 0.0, %v512
        %514 = vmatprep.mubr.f32.mxu0 0.0
        %515 = vmatmul.mubr.f32.gmra.mrb[0].mxu0 %v295
        %v516 = vpop.f32.mrb[0].mxu0
        %v517 = vadd.f32 0.0, %v516
        %v518 = vpop.f32.mrb[0].mxu0
        %v519 = vadd.f32 0.0, %v518
        %520 = vmatprep.mubr.f32.mxu0 0.0
        %521 = vmatmul.mubr.f32.gmra.mrb[0].mxu0 %v296
        %v522 = vpop.f32.mrb[0].mxu0
        %v523 = vadd.f32 0.0, %v522
        %v524 = vpop.f32.mrb[0].mxu0
        %v525 = vadd.f32 0.0, %v524
        %526 = vmatprep.mubr.f32.mxu0 0.0
        %527 = vmatmul.mubr.f32.gmra.mrb[0].mxu0 %v297
        %v528 = vpop.f32.mrb[0].mxu0
        %v529 = vadd.f32 0.0, %v528
        %v530 = vpop.f32.mrb[0].mxu0
        %v531 = vadd.f32 0.0, %v530
        %532 = vmatprep.mubr.f32.mxu0 0.0
        %533 = vmatmul.mubr.f32.gmra.mrb[0].mxu0 %v298
        %v534 = vpop.f32.mrb[0].mxu0
        %v535 = vadd.f32 0.0, %v534
        %v536 = vpop.f32.mrb[0].mxu0
        %v537 = vadd.f32 0.0, %v536
        %538 = vmatprep.mubr.f32.mxu0 0.0
        %539 = vmatmul.mubr.f32.gmra.mrb[0].mxu0 %v299
        %v540 = vpop.f32.mrb[0].mxu0
        %v541 = vadd.f32 0.0, %v540
        %v542 = vpop.f32.mrb[0].mxu0
        %v543 = vadd.f32 0.0, %v542
        %544 = vmatprep.mubr.f32.mxu0 0.0
        %545 = vmatmul.mubr.f32.gmra.mrb[0].mxu0 %v300
        %v546 = vpop.f32.mrb[0].mxu0
        %v547 = vadd.f32 0.0, %v546
        %v548 = vpop.f32.mrb[0].mxu0
        %v549 = vadd.f32 0.0, %v548
        %550 = vmatprep.mubr.f32.mxu0 0.0
        %551 = vmatmul.mubr.f32.gmra.mrb[0].mxu0 %v301
        %v552 = vpop.f32.mrb[0].mxu0
        %v553 = vadd.f32 0.0, %v552
        %v554 = vpop.f32.mrb[0].mxu0
        %v555 = vadd.f32 0.0, %v554
        %556 = vmatprep.mubr.f32.mxu0 0.0
        %557 = vmatmul.mubr.f32.gmra.mrb[0].mxu0 %v302
        %v558 = vpop.f32.mrb[0].mxu0
        %v559 = vadd.f32 0.0, %v558
        %v560 = vpop.f32.mrb[0].mxu0
        %v561 = vadd.f32 0.0, %v560
        %562 = vmatprep.mubr.f32.mxu0 0.0
        %563 = vmatmul.mubr.f32.gmra.mrb[0].mxu0 %v303
        %v564 = vpop.f32.mrb[0].mxu0
        %v565 = vadd.f32 0.0, %v564
        %v566 = vpop.f32.mrb[0].mxu0
        %v567 = vadd.f32 0.0, %v566
        %568 = vmatprep.mubr.f32.mxu0 0.0
        %569 = vmatmul.mubr.f32.gmra.mrb[0].mxu0 %v304
        %v570 = vpop.f32.mrb[0].mxu0
        %v571 = vadd.f32 0.0, %v570
        %v572 = vpop.f32.mrb[0].mxu0
        %v573 = vadd.f32 0.0, %v572
        %574 = vmatprep.mubr.f32.mxu0 0.0
        %575 = vmatmul.mubr.f32.gmra.mrb[0].mxu0 %v305
        %v576 = vpop.f32.mrb[0].mxu0
        %v577 = vadd.f32 0.0, %v576
        %v578 = vpop.f32.mrb[0].mxu0
        %v579 = vadd.f32 0.0, %v578
        %580 = vmatprep.mubr.f32.mxu0 0.0
        %581 = vmatmul.mubr.f32.gmra.mrb[0].mxu0 %v306
        %v582 = vpop.f32.mrb[0].mxu0
        %v583 = vadd.f32 0.0, %v582
        %v584 = vpop.f32.mrb[0].mxu0
        %v585 = vadd.f32 0.0, %v584
        %586 = vmatprep.mubr.f32.mxu0 0.0
        %587 = vmatmul.mubr.f32.gmra.mrb[0].mxu0 %v307
        %v588 = vpop.f32.mrb[0].mxu0
        %v589 = vadd.f32 0.0, %v588
        %v590 = vpop.f32.mrb[0].mxu0
        %v591 = vadd.f32 0.0, %v590
        %592 = vmatprep.mubr.f32.mxu0 0.0
        %593 = vmatmul.mubr.f32.gmra.mrb[0].mxu0 %v308
        %v594 = vpop.f32.mrb[0].mxu0
        %v595 = vadd.f32 0.0, %v594
        %v596 = vpop.f32.mrb[0].mxu0
        %v597 = vadd.f32 0.0, %v596
        %598 = vmatprep.mubr.f32.mxu0 0.0
        %599 = vmatmul.mubr.f32.gmra.mrb[0].mxu0 %v309
        %v600 = vpop.f32.mrb[0].mxu0
        %v601 = vadd.f32 0.0, %v600
        %v602 = vpop.f32.mrb[0].mxu0
        %v603 = vadd.f32 0.0, %v602
        %604 = vmatprep.mubr.f32.mxu0 0.0
        %605 = vmatmul.mubr.f32.gmra.mrb[0].mxu0 %v310
        %v606 = vpop.f32.mrb[0].mxu0
        %v607 = vadd.f32 0.0, %v606
        %v608 = vpop.f32.mrb[0].mxu0
        %v609 = vadd.f32 0.0, %v608
        %610 = vmatprep.mubr.f32.mxu0 0.0
        %611 = vmatmul.mubr.f32.gmra.mrb[0].mxu0 %v311
        %v612 = vpop.f32.mrb[0].mxu0
        %v613 = vadd.f32 0.0, %v612
        %v614 = vpop.f32.mrb[0].mxu0
        %v615 = vadd.f32 0.0, %v614
        %616 = vmatprep.mubr.f32.mxu0 0.0
        %617 = vmatmul.mubr.f32.gmra.mrb[0].mxu0 %v312
        %v618 = vpop.f32.mrb[0].mxu0
        %v619 = vadd.f32 0.0, %v618
        %v620 = vpop.f32.mrb[0].mxu0
        %v621 = vadd.f32 0.0, %v620
        %622 = vmatprep.mubr.f32.mxu0 0.0
        %623 = vmatmul.mubr.f32.gmra.mrb[0].mxu0 %v313
        %v624 = vpop.f32.mrb[0].mxu0
        %v625 = vadd.f32 0.0, %v624
        %v626 = vpop.f32.mrb[0].mxu0
        %v627 = vadd.f32 0.0, %v626
        %628 = vmatprep.mubr.f32.mxu0 0.0
        %629 = vmatmul.mubr.f32.gmra.mrb[0].mxu0 %v314
        %v630 = vpop.f32.mrb[0].mxu0
        %v631 = vadd.f32 0.0, %v630
        %v632 = vpop.f32.mrb[0].mxu0
        %v633 = vadd.f32 0.0, %v632
        %634 = vmatprep.mubr.f32.mxu0 0.0
        %635 = vmatmul.mubr.f32.gmra.mrb[0].mxu0 %v315
        %v636 = vpop.f32.mrb[0].mxu0
        %v637 = vadd.f32 0.0, %v636
        %v638 = vpop.f32.mrb[0].mxu0
        %v639 = vadd.f32 0.0, %v638
        %640 = vmatprep.mubr.f32.mxu0 0.0
        %641 = vmatmul.mubr.f32.gmra.mrb[0].mxu0 %v316
        %v642 = vpop.f32.mrb[0].mxu0
        %v643 = vadd.f32 0.0, %v642
        %v644 = vpop.f32.mrb[0].mxu0
        %v645 = vadd.f32 0.0, %v644
        %646 = vmatprep.mubr.f32.mxu0 0.0
        %647 = vmatmul.mubr.f32.gmra.mrb[0].mxu0 %v317
        %v648 = vpop.f32.mrb[0].mxu0
        %v649 = vadd.f32 0.0, %v648
        %v650 = vpop.f32.mrb[0].mxu0
        %v651 = vadd.f32 0.0, %v650
        %652 = vmatprep.mubr.f32.mxu0 0.0
        %653 = vmatmul.mubr.f32.gmra.mrb[0].mxu0 %v318
        %v654 = vpop.f32.mrb[0].mxu0
        %v655 = vadd.f32 0.0, %v654
        %v656 = vpop.f32.mrb[0].mxu0
        %v657 = vadd.f32 0.0, %v656
        %658 = vmatprep.mubr.f32.mxu0 0.0
        %659 = vmatmul.mubr.f32.gmra.mrb[0].mxu0 %v319
        %v660 = vpop.f32.mrb[0].mxu0
        %v661 = vadd.f32 0.0, %v660
        %v662 = vpop.f32.mrb[0].mxu0
        %v663 = vadd.f32 0.0, %v662
        %664 = vmatprep.mubr.f32.mxu0 0.0
        %665 = vmatmul.mubr.f32.gmra.mrb[0].mxu0 %v320
        %v666 = vpop.f32.mrb[0].mxu0
        %v667 = vadd.f32 0.0, %v666
        %v668 = vpop.f32.mrb[0].mxu0
        %v669 = vadd.f32 0.0, %v668
        %670 = vmatprep.mubr.f32.mxu0 0.0
        %671 = vmatmul.mubr.f32.gmra.mrb[0].mxu0 %v321
        %v672 = vpop.f32.mrb[0].mxu0
        %v673 = vadd.f32 0.0, %v672
        %v674 = vpop.f32.mrb[0].mxu0
        %v675 = vadd.f32 0.0, %v674
        %676 = vmatprep.mubr.f32.mxu0 0.0
        %677 = vmatmul.mubr.f32.gmra.mrb[0].mxu0 %v322
        %v678 = vpop.f32.mrb[0].mxu0
        %v679 = vadd.f32 0.0, %v678
        %v680 = vpop.f32.mrb[0].mxu0
        %v681 = vadd.f32 0.0, %v680
        %682 = vmatprep.mubr.f32.mxu0 0.0
        %683 = vmatmul.mubr.f32.gmra.mrb[0].mxu0 %v323
        %v684 = vpop.f32.mrb[0].mxu0
        %v685 = vadd.f32 0.0, %v684
        %v686 = vpop.f32.mrb[0].mxu0
        %v687 = vadd.f32 0.0, %v686
        %688 = vmatprep.mubr.f32.mxu0 0.0
        %689 = vmatmul.mubr.f32.gmra.mrb[0].mxu0 %v324
        %v690 = vpop.f32.mrb[0].mxu0
        %v691 = vadd.f32 0.0, %v690
        %v692 = vpop.f32.mrb[0].mxu0
        %v693 = vadd.f32 0.0, %v692
        %694 = vmatprep.mubr.f32.mxu0 0.0
        %695 = vmatmul.mubr.f32.gmra.mrb[0].mxu0 %v325
        %v696 = vpop.f32.mrb[0].mxu0
        %v697 = vadd.f32 0.0, %v696
        %v698 = vpop.f32.mrb[0].mxu0
        %v699 = vadd.f32 0.0, %v698
        %700 = vmatprep.mubr.f32.mxu0 0.0
        %701 = vmatmul.mubr.f32.gmra.mrb[0].mxu0 %v326
        %v702 = vpop.f32.mrb[0].mxu0
        %v703 = vadd.f32 0.0, %v702
        %v704 = vpop.f32.mrb[0].mxu0
        %v705 = vadd.f32 0.0, %v704
        %706 = vmatprep.mubr.f32.mxu0 0.0
        %707 = vmatmul.mubr.f32.gmra.mrb[0].mxu0 %v327
        %v708 = vpop.f32.mrb[0].mxu0
        %v709 = vadd.f32 0.0, %v708
        %v710 = vpop.f32.mrb[0].mxu0
        %v711 = vadd.f32 0.0, %v710
        %712 = vdwg.mxu0
        %713 = vst [vmem:[#allocation2] sm:$0xff] %v427
        %714 = vst [vmem:[#allocation2 + $0x8] sm:$0xff] %v433
        %715 = vst [vmem:[#allocation2 + $0x10] sm:$0xff] %v439
        %716 = vst [vmem:[#allocation2 + $0x18] sm:$0xff] %v445
        %717 = vst [vmem:[#allocation2 + $0x20] sm:$0xff] %v451
        %718 = vst [vmem:[#allocation2 + $0x28] sm:$0xff] %v457
        %719 = vst [vmem:[#allocation2 + $0x30] sm:$0xff] %v463
        %720 = vst [vmem:[#allocation2 + $0x38] sm:$0xff] %v469
        %721 = vst [vmem:[#allocation2 + $0x40] sm:$0xff] %v475
        %722 = vst [vmem:[#allocation2 + $0x48] sm:$0xff] %v481
        %723 = vst [vmem:[#allocation2 + $0x50] sm:$0xff] %v487
        %724 = vst [vmem:[#allocation2 + $0x58] sm:$0xff] %v493
        %725 = vst [vmem:[#allocation2 + $0x60] sm:$0xff] %v499
        %726 = vst [vmem:[#allocation2 + $0x68] sm:$0xff] %v505
        %727 = vst [vmem:[#allocation2 + $0x70] sm:$0xff] %v511
        %728 = vst [vmem:[#allocation2 + $0x78] sm:$0xff] %v517
        %729 = vst [vmem:[#allocation2 + $0x80] sm:$0xff] %v523
        %730 = vst [vmem:[#allocation2 + $0x88] sm:$0xff] %v529
        %731 = vst [vmem:[#allocation2 + $0x90] sm:$0xff] %v535
        %732 = vst [vmem:[#allocation2 + $0x98] sm:$0xff] %v541
        %733 = vst [vmem:[#allocation2 + $0xa0] sm:$0xff] %v547
        %734 = vst [vmem:[#allocation2 + $0xa8] sm:$0xff] %v553
        %735 = vst [vmem:[#allocation2 + $0xb0] sm:$0xff] %v559
        %736 = vst [vmem:[#allocation2 + $0xb8] sm:$0xff] %v565
        %737 = vst [vmem:[#allocation2 + $0xc0] sm:$0xff] %v571
        %738 = vst [vmem:[#allocation2 + $0xc8] sm:$0xff] %v577
        %739 = vst [vmem:[#allocation2 + $0xd0] sm:$0xff] %v583
        %740 = vst [vmem:[#allocation2 + $0xd8] sm:$0xff] %v589
        %741 = vst [vmem:[#allocation2 + $0xe0] sm:$0xff] %v595
        %742 = vst [vmem:[#allocation2 + $0xe8] sm:$0xff] %v601
        %743 = vst [vmem:[#allocation2 + $0xf0] sm:$0xff] %v607
        %744 = vst [vmem:[#allocation2 + $0xf8] sm:$0xff] %v613
        %745 = vst [vmem:[#allocation2 + $0x100] sm:$0xff] %v619
        %746 = vst [vmem:[#allocation2 + $0x108] sm:$0xff] %v625
        %747 = vst [vmem:[#allocation2 + $0x110] sm:$0xff] %v631
        %748 = vst [vmem:[#allocation2 + $0x118] sm:$0xff] %v637
        %749 = vst [vmem:[#allocation2 + $0x120] sm:$0xff] %v643
        %750 = vst [vmem:[#allocation2 + $0x128] sm:$0xff] %v649
        %751 = vst [vmem:[#allocation2 + $0x130] sm:$0xff] %v655
        %752 = vst [vmem:[#allocation2 + $0x138] sm:$0xff] %v661
        %753 = vst [vmem:[#allocation2 + $0x140] sm:$0xff] %v667
        %754 = vst [vmem:[#allocation2 + $0x148] sm:$0xff] %v673
        %755 = vst [vmem:[#allocation2 + $0x150] sm:$0xff] %v679
        %756 = vst [vmem:[#allocation2 + $0x158] sm:$0xff] %v685
        %757 = vst [vmem:[#allocation2 + $0x160] sm:$0xff] %v691
        %758 = vst [vmem:[#allocation2 + $0x168] sm:$0xff] %v697
        %759 = vst [vmem:[#allocation2 + $0x170] sm:$0xff] %v703
        %760 = vst [vmem:[#allocation2 + $0x178] sm:$0xff] %v709
        %v761 = vld [vmem:[%s4 + $0x2] sm:$0x1]
        %v762 = vlaneseq
        %v763 = vshrl.u32 %v762, 7
        %v764 = vsub.s32 0, %v763
        %v765 = vrot.slane %v761, %v764
        %v766 = vadd.f32 %v429, %v765
        %v767 = vadd.f32 %v435, %v765
        %v768 = vadd.f32 %v441, %v765
        %v769 = vadd.f32 %v447, %v765
        %v770 = vadd.f32 %v453, %v765
        %v771 = vadd.f32 %v459, %v765
        %v772 = vadd.f32 %v465, %v765
        %v773 = vadd.f32 %v471, %v765
        %v774 = vadd.f32 %v477, %v765
        %v775 = vadd.f32 %v483, %v765
        %v776 = vadd.f32 %v489, %v765
        %v777 = vadd.f32 %v495, %v765
        %v778 = vadd.f32 %v501, %v765
        %v779 = vadd.f32 %v507, %v765
        %v780 = vadd.f32 %v513, %v765
        %v781 = vadd.f32 %v519, %v765
        %v782 = vadd.f32 %v525, %v765
        %v783 = vadd.f32 %v531, %v765
        %v784 = vadd.f32 %v537, %v765
        %v785 = vadd.f32 %v543, %v765
        %v786 = vadd.f32 %v549, %v765
        %v787 = vadd.f32 %v555, %v765
        %v788 = vadd.f32 %v561, %v765
        %v789 = vadd.f32 %v567, %v765
        %v790 = vadd.f32 %v573, %v765
        %v791 = vadd.f32 %v579, %v765
        %v792 = vadd.f32 %v585, %v765
        %v793 = vadd.f32 %v591, %v765
        %v794 = vadd.f32 %v597, %v765
        %v795 = vadd.f32 %v603, %v765
        %v796 = vadd.f32 %v609, %v765
        %v797 = vadd.f32 %v615, %v765
        %v798 = vadd.f32 %v621, %v765
        %v799 = vadd.f32 %v627, %v765
        %v800 = vadd.f32 %v633, %v765
        %v801 = vadd.f32 %v639, %v765
        %v802 = vadd.f32 %v645, %v765
        %v803 = vadd.f32 %v651, %v765
        %v804 = vadd.f32 %v657, %v765
        %v805 = vadd.f32 %v663, %v765
        %v806 = vadd.f32 %v669, %v765
        %v807 = vadd.f32 %v675, %v765
        %v808 = vadd.f32 %v681, %v765
        %v809 = vadd.f32 %v687, %v765
        %v810 = vadd.f32 %v693, %v765
        %v811 = vadd.f32 %v699, %v765
        %v812 = vadd.f32 %v705, %v765
        %v813 = vadd.f32 %v711, %v765
        %814 = vst [vmem:[#allocation3] sm:$0xff] %v766
        %815 = vst [vmem:[#allocation3 + $0x8] sm:$0xff] %v767
        %816 = vst [vmem:[#allocation3 + $0x10] sm:$0xff] %v768
        %817 = vst [vmem:[#allocation3 + $0x18] sm:$0xff] %v769
        %818 = vst [vmem:[#allocation3 + $0x20] sm:$0xff] %v770
        %819 = vst [vmem:[#allocation3 + $0x28] sm:$0xff] %v771
        %820 = vst [vmem:[#allocation3 + $0x30] sm:$0xff] %v772
        %821 = vst [vmem:[#allocation3 + $0x38] sm:$0xff] %v773
        %822 = vst [vmem:[#allocation3 + $0x40] sm:$0xff] %v774
        %823 = vst [vmem:[#allocation3 + $0x48] sm:$0xff] %v775
        %824 = vst [vmem:[#allocation3 + $0x50] sm:$0xff] %v776
        %825 = vst [vmem:[#allocation3 + $0x58] sm:$0xff] %v777
        %826 = vst [vmem:[#allocation3 + $0x60] sm:$0xff] %v778
        %827 = vst [vmem:[#allocation3 + $0x68] sm:$0xff] %v779
        %828 = vst [vmem:[#allocation3 + $0x70] sm:$0xff] %v780
        %829 = vst [vmem:[#allocation3 + $0x78] sm:$0xff] %v781
        %830 = vst [vmem:[#allocation3 + $0x80] sm:$0xff] %v782
        %831 = vst [vmem:[#allocation3 + $0x88] sm:$0xff] %v783
        %832 = vst [vmem:[#allocation3 + $0x90] sm:$0xff] %v784
        %833 = vst [vmem:[#allocation3 + $0x98] sm:$0xff] %v785
        %834 = vst [vmem:[#allocation3 + $0xa0] sm:$0xff] %v786
        %835 = vst [vmem:[#allocation3 + $0xa8] sm:$0xff] %v787
        %836 = vst [vmem:[#allocation3 + $0xb0] sm:$0xff] %v788
        %837 = vst [vmem:[#allocation3 + $0xb8] sm:$0xff] %v789
        %838 = vst [vmem:[#allocation3 + $0xc0] sm:$0xff] %v790
        %839 = vst [vmem:[#allocation3 + $0xc8] sm:$0xff] %v791
        %840 = vst [vmem:[#allocation3 + $0xd0] sm:$0xff] %v792
        %841 = vst [vmem:[#allocation3 + $0xd8] sm:$0xff] %v793
        %842 = vst [vmem:[#allocation3 + $0xe0] sm:$0xff] %v794
        %843 = vst [vmem:[#allocation3 + $0xe8] sm:$0xff] %v795
        %844 = vst [vmem:[#allocation3 + $0xf0] sm:$0xff] %v796
        %845 = vst [vmem:[#allocation3 + $0xf8] sm:$0xff] %v797
        %846 = vst [vmem:[#allocation3 + $0x100] sm:$0xff] %v798
        %847 = vst [vmem:[#allocation3 + $0x108] sm:$0xff] %v799
        %848 = vst [vmem:[#allocation3 + $0x110] sm:$0xff] %v800
        %849 = vst [vmem:[#allocation3 + $0x118] sm:$0xff] %v801
        %850 = vst [vmem:[#allocation3 + $0x120] sm:$0xff] %v802
        %851 = vst [vmem:[#allocation3 + $0x128] sm:$0xff] %v803
        %852 = vst [vmem:[#allocation3 + $0x130] sm:$0xff] %v804
        %853 = vst [vmem:[#allocation3 + $0x138] sm:$0xff] %v805
        %854 = vst [vmem:[#allocation3 + $0x140] sm:$0xff] %v806
        %855 = vst [vmem:[#allocation3 + $0x148] sm:$0xff] %v807
        %856 = vst [vmem:[#allocation3 + $0x150] sm:$0xff] %v808
        %857 = vst [vmem:[#allocation3 + $0x158] sm:$0xff] %v809
        %858 = vst [vmem:[#allocation3 + $0x160] sm:$0xff] %v810
        %859 = vst [vmem:[#allocation3 + $0x168] sm:$0xff] %v811
        %860 = vst [vmem:[#allocation3 + $0x170] sm:$0xff] %v812
        %861 = vst [vmem:[#allocation3 + $0x178] sm:$0xff] %v813
      $region44: #{residual_gcn_forward.1} parent=39 // pred_fallthru
        _
      %p862 = scmp.eq.s32.totalorder %s21, 1
      %p863 = pnand %p274, %p862
      %p864 = pneg %p863
      // Predicated region
      $region45: #{residual_gcn_forward.1} parent=39 // pred_check
        _
      $region46: #{residual_gcn_forward.1} parent=39 // pred_check_branch
        %866 = sbr.rel (%p863) target = $region48
      $region47: #{residual_gcn_forward.1} parent=39 // pred_region
        %v867 = vld [vmem:[#allocation4] sm:$0xff]
        %v868 = vld [vmem:[#allocation4 + $0x8] sm:$0xff]
        %v869 = vld [vmem:[#allocation4 + $0x10] sm:$0xff]
        %v870 = vld [vmem:[#allocation4 + $0x18] sm:$0xff]
        %v871 = vld [vmem:[#allocation4 + $0x20] sm:$0xff]
        %v872 = vld [vmem:[#allocation4 + $0x28] sm:$0xff]
        %v873 = vld [vmem:[#allocation4 + $0x30] sm:$0xff]
        %v874 = vld [vmem:[#allocation4 + $0x38] sm:$0xff]
        %v875 = vld [vmem:[#allocation4 + $0x40] sm:$0xff]
        %v876 = vld [vmem:[#allocation4 + $0x48] sm:$0xff]
        %v877 = vld [vmem:[#allocation4 + $0x50] sm:$0xff]
        %v878 = vld [vmem:[#allocation4 + $0x58] sm:$0xff]
        %v879 = vld [vmem:[#allocation4 + $0x60] sm:$0xff]
        %v880 = vld [vmem:[#allocation4 + $0x68] sm:$0xff]
        %v881 = vld [vmem:[#allocation4 + $0x70] sm:$0xff]
        %v882 = vld [vmem:[#allocation4 + $0x78] sm:$0xff]
        %v883 = vld [vmem:[#allocation4 + $0x80] sm:$0xff]
        %v884 = vld [vmem:[#allocation4 + $0x88] sm:$0xff]
        %v885 = vld [vmem:[#allocation4 + $0x90] sm:$0xff]
        %v886 = vld [vmem:[#allocation4 + $0x98] sm:$0xff]
        %v887 = vld [vmem:[#allocation4 + $0xa0] sm:$0xff]
        %v888 = vld [vmem:[#allocation4 + $0xa8] sm:$0xff]
        %v889 = vld [vmem:[#allocation4 + $0xb0] sm:$0xff]
        %v890 = vld [vmem:[#allocation4 + $0xb8] sm:$0xff]
        %v891 = vld [vmem:[#allocation4 + $0xc0] sm:$0xff]
        %v892 = vld [vmem:[#allocation4 + $0xc8] sm:$0xff]
        %v893 = vld [vmem:[#allocation4 + $0xd0] sm:$0xff]
        %v894 = vld [vmem:[#allocation4 + $0xd8] sm:$0xff]
        %v895 = vld [vmem:[#allocation4 + $0xe0] sm:$0xff]
        %v896 = vld [vmem:[#allocation4 + $0xe8] sm:$0xff]
        %v897 = vld [vmem:[#allocation4 + $0xf0] sm:$0xff]
        %v898 = vld [vmem:[#allocation4 + $0xf8] sm:$0xff]
        %v899 = vld [vmem:[#allocation4 + $0x100] sm:$0xff]
        %v900 = vld [vmem:[#allocation4 + $0x108] sm:$0xff]
        %v901 = vld [vmem:[#allocation4 + $0x110] sm:$0xff]
        %v902 = vld [vmem:[#allocation4 + $0x118] sm:$0xff]
        %v903 = vld [vmem:[#allocation4 + $0x120] sm:$0xff]
        %v904 = vld [vmem:[#allocation4 + $0x128] sm:$0xff]
        %v905 = vld [vmem:[#allocation4 + $0x130] sm:$0xff]
        %v906 = vld [vmem:[#allocation4 + $0x138] sm:$0xff]
        %v907 = vld [vmem:[#allocation4 + $0x140] sm:$0xff]
        %v908 = vld [vmem:[#allocation4 + $0x148] sm:$0xff]
        %v909 = vld [vmem:[#allocation4 + $0x150] sm:$0xff]
        %v910 = vld [vmem:[#allocation4 + $0x158] sm:$0xff]
        %v911 = vld [vmem:[#allocation4 + $0x160] sm:$0xff]
        %v912 = vld [vmem:[#allocation4 + $0x168] sm:$0xff]
        %v913 = vld [vmem:[#allocation4 + $0x170] sm:$0xff]
        %v914 = vld [vmem:[#allocation4 + $0x178] sm:$0xff]
        %v915 = vld [vmem:[%s3] sm:$0xff]
        %v916 = vld [vmem:[%s3 + $0x8] sm:$0xff]
        %v917 = vld [vmem:[%s3 + $0x10] sm:$0xff]
        %v918 = vld [vmem:[%s3 + $0x18] sm:$0xff]
        %v919 = vld [vmem:[%s3 + $0x20] sm:$0xff]
        %v920 = vld [vmem:[%s3 + $0x28] sm:$0xff]
        %v921 = vld [vmem:[%s3 + $0x30] sm:$0xff]
        %v922 = vld [vmem:[%s3 + $0x38] sm:$0xff]
        %v923 = vld [vmem:[%s3 + $0x40] sm:$0xff]
        %v924 = vld [vmem:[%s3 + $0x48] sm:$0xff]
        %v925 = vld [vmem:[%s3 + $0x50] sm:$0xff]
        %v926 = vld [vmem:[%s3 + $0x58] sm:$0xff]
        %v927 = vld [vmem:[%s3 + $0x60] sm:$0xff]
        %v928 = vld [vmem:[%s3 + $0x68] sm:$0xff]
        %v929 = vld [vmem:[%s3 + $0x70] sm:$0xff]
        %v930 = vld [vmem:[%s3 + $0x78] sm:$0xff]
        %v931 = vld [vmem:[%s3 + $0x80] sm:$0xff]
        %v932 = vld [vmem:[%s3 + $0x88] sm:$0xff]
        %v933 = vld [vmem:[%s3 + $0x90] sm:$0xff]
        %v934 = vld [vmem:[%s3 + $0x98] sm:$0xff]
        %v935 = vld [vmem:[%s3 + $0xa0] sm:$0xff]
        %v936 = vld [vmem:[%s3 + $0xa8] sm:$0xff]
        %v937 = vld [vmem:[%s3 + $0xb0] sm:$0xff]
        %v938 = vld [vmem:[%s3 + $0xb8] sm:$0xff]
        %v939 = vld [vmem:[%s3 + $0xc0] sm:$0xff]
        %v940 = vld [vmem:[%s3 + $0xc8] sm:$0xff]
        %v941 = vld [vmem:[%s3 + $0xd0] sm:$0xff]
        %v942 = vld [vmem:[%s3 + $0xd8] sm:$0xff]
        %v943 = vld [vmem:[%s3 + $0xe0] sm:$0xff]
        %v944 = vld [vmem:[%s3 + $0xe8] sm:$0xff]
        %v945 = vld [vmem:[%s3 + $0xf0] sm:$0xff]
        %v946 = vld [vmem:[%s3 + $0xf8] sm:$0xff]
        %947 = vmatprep.subr.mxu0 %v916
        %948 = vmatpush1.msra.mxu0 %v915
        %949 = vmatprep.subr.mxu0 %v918
        %950 = vmatpush1.msra.mxu0 %v917
        %951 = vmatprep.subr.mxu0 %v920
        %952 = vmatpush1.msra.mxu0 %v919
        %953 = vmatprep.subr.mxu0 %v922
        %954 = vmatpush1.msra.mxu0 %v921
        %955 = vmatprep.subr.mxu0 %v924
        %956 = vmatpush1.msra.mxu0 %v923
        %957 = vmatprep.subr.mxu0 %v926
        %958 = vmatpush1.msra.mxu0 %v925
        %959 = vmatprep.subr.mxu0 %v928
        %960 = vmatpush1.msra.mxu0 %v927
        %961 = vmatprep.subr.mxu0 %v930
        %962 = vmatpush1.msra.mxu0 %v929
        %963 = vmatprep.subr.mxu0 %v932
        %964 = vmatpush1.msra.mxu0 %v931
        %965 = vmatprep.subr.mxu0 %v934
        %966 = vmatpush1.msra.mxu0 %v933
        %967 = vmatprep.subr.mxu0 %v936
        %968 = vmatpush1.msra.mxu0 %v935
        %969 = vmatprep.subr.mxu0 %v938
        %970 = vmatpush1.msra.mxu0 %v937
        %971 = vmatprep.subr.mxu0 %v940
        %972 = vmatpush1.msra.mxu0 %v939
        %973 = vmatprep.subr.mxu0 %v942
        %974 = vmatpush1.msra.mxu0 %v941
        %975 = vmatprep.subr.mxu0 %v944
        %976 = vmatpush1.msra.mxu0 %v943
        %977 = vmatprep.subr.mxu0 %v946
        %978 = vmatpush1.msra.mxu0 %v945
        %979 = vmatprep.subr.mxu0 0.0
        %980 = vmatpush1.msra.mxu0 0.0
        %981 = vmatprep.subr.mxu0 0.0
        %982 = vmatpush1.msra.mxu0 0.0
        %983 = vmatprep.subr.mxu0 0.0
        %984 = vmatpush1.msra.mxu0 0.0
        %985 = vmatprep.subr.mxu0 0.0
        %986 = vmatpush1.msra.mxu0 0.0
        %987 = vmatprep.subr.mxu0 0.0
        %988 = vmatpush1.msra.mxu0 0.0
        %989 = vmatprep.subr.mxu0 0.0
        %990 = vmatpush1.msra.mxu0 0.0
        %991 = vmatprep.subr.mxu0 0.0
        %992 = vmatpush1.msra.mxu0 0.0
        %993 = vmatprep.subr.mxu0 0.0
        %994 = vmatpush1.msra.mxu0 0.0
        %995 = vmatprep.subr.mxu0 0.0
        %996 = vmatpush1.msra.mxu0 0.0
        %997 = vmatprep.subr.mxu0 0.0
        %998 = vmatpush1.msra.mxu0 0.0
        %999 = vmatprep.subr.mxu0 0.0
        %1000 = vmatpush1.msra.mxu0 0.0
        %1001 = vmatprep.subr.mxu0 0.0
        %1002 = vmatpush1.msra.mxu0 0.0
        %1003 = vmatprep.subr.mxu0 0.0
        %1004 = vmatpush1.msra.mxu0 0.0
        %1005 = vmatprep.subr.mxu0 0.0
        %1006 = vmatpush1.msra.mxu0 0.0
        %1007 = vmatprep.subr.mxu0 0.0
        %1008 = vmatpush1.msra.mxu0 0.0
        %1009 = vmatprep.subr.mxu0 0.0
        %1010 = vmatpush1.msra.mxu0 0.0
        %1011 = vmatprep.mubr.f32.mxu0 0.0
        %1012 = vmatmul.mubr.f32.gmra.mrb[0].mxu0 %v867
        %v1013 = vpop.f32.mrb[0].mxu0
        %v1014 = vadd.f32 0.0, %v1013
        %v1015 = vpop.f32.mrb[0].mxu0
        %v1016 = vadd.f32 0.0, %v1015
        %1017 = vmatprep.mubr.f32.mxu0 0.0
        %1018 = vmatmul.mubr.f32.gmra.mrb[0].mxu0 %v868
        %v1019 = vpop.f32.mrb[0].mxu0
        %v1020 = vadd.f32 0.0, %v1019
        %v1021 = vpop.f32.mrb[0].mxu0
        %v1022 = vadd.f32 0.0, %v1021
        %1023 = vmatprep.mubr.f32.mxu0 0.0
        %1024 = vmatmul.mubr.f32.gmra.mrb[0].mxu0 %v869
        %v1025 = vpop.f32.mrb[0].mxu0
        %v1026 = vadd.f32 0.0, %v1025
        %v1027 = vpop.f32.mrb[0].mxu0
        %v1028 = vadd.f32 0.0, %v1027
        %1029 = vmatprep.mubr.f32.mxu0 0.0
        %1030 = vmatmul.mubr.f32.gmra.mrb[0].mxu0 %v870
        %v1031 = vpop.f32.mrb[0].mxu0
        %v1032 = vadd.f32 0.0, %v1031
        %v1033 = vpop.f32.mrb[0].mxu0
        %v1034 = vadd.f32 0.0, %v1033
        %1035 = vmatprep.mubr.f32.mxu0 0.0
        %1036 = vmatmul.mubr.f32.gmra.mrb[0].mxu0 %v871
        %v1037 = vpop.f32.mrb[0].mxu0
        %v1038 = vadd.f32 0.0, %v1037
        %v1039 = vpop.f32.mrb[0].mxu0
        %v1040 = vadd.f32 0.0, %v1039
        %1041 = vmatprep.mubr.f32.mxu0 0.0
        %1042 = vmatmul.mubr.f32.gmra.mrb[0].mxu0 %v872
        %v1043 = vpop.f32.mrb[0].mxu0
        %v1044 = vadd.f32 0.0, %v1043
        %v1045 = vpop.f32.mrb[0].mxu0
        %v1046 = vadd.f32 0.0, %v1045
        %1047 = vmatprep.mubr.f32.mxu0 0.0
        %1048 = vmatmul.mubr.f32.gmra.mrb[0].mxu0 %v873
        %v1049 = vpop.f32.mrb[0].mxu0
        %v1050 = vadd.f32 0.0, %v1049
        %v1051 = vpop.f32.mrb[0].mxu0
        %v1052 = vadd.f32 0.0, %v1051
        %1053 = vmatprep.mubr.f32.mxu0 0.0
        %1054 = vmatmul.mubr.f32.gmra.mrb[0].mxu0 %v874
        %v1055 = vpop.f32.mrb[0].mxu0
        %v1056 = vadd.f32 0.0, %v1055
        %v1057 = vpop.f32.mrb[0].mxu0
        %v1058 = vadd.f32 0.0, %v1057
        %1059 = vmatprep.mubr.f32.mxu0 0.0
        %1060 = vmatmul.mubr.f32.gmra.mrb[0].mxu0 %v875
        %v1061 = vpop.f32.mrb[0].mxu0
        %v1062 = vadd.f32 0.0, %v1061
        %v1063 = vpop.f32.mrb[0].mxu0
        %v1064 = vadd.f32 0.0, %v1063
        %1065 = vmatprep.mubr.f32.mxu0 0.0
        %1066 = vmatmul.mubr.f32.gmra.mrb[0].mxu0 %v876
        %v1067 = vpop.f32.mrb[0].mxu0
        %v1068 = vadd.f32 0.0, %v1067
        %v1069 = vpop.f32.mrb[0].mxu0
        %v1070 = vadd.f32 0.0, %v1069
        %1071 = vmatprep.mubr.f32.mxu0 0.0
        %1072 = vmatmul.mubr.f32.gmra.mrb[0].mxu0 %v877
        %v1073 = vpop.f32.mrb[0].mxu0
        %v1074 = vadd.f32 0.0, %v1073
        %v1075 = vpop.f32.mrb[0].mxu0
        %v1076 = vadd.f32 0.0, %v1075
        %1077 = vmatprep.mubr.f32.mxu0 0.0
        %1078 = vmatmul.mubr.f32.gmra.mrb[0].mxu0 %v878
        %v1079 = vpop.f32.mrb[0].mxu0
        %v1080 = vadd.f32 0.0, %v1079
        %v1081 = vpop.f32.mrb[0].mxu0
        %v1082 = vadd.f32 0.0, %v1081
        %1083 = vmatprep.mubr.f32.mxu0 0.0
        %1084 = vmatmul.mubr.f32.gmra.mrb[0].mxu0 %v879
        %v1085 = vpop.f32.mrb[0].mxu0
        %v1086 = vadd.f32 0.0, %v1085
        %v1087 = vpop.f32.mrb[0].mxu0
        %v1088 = vadd.f32 0.0, %v1087
        %1089 = vmatprep.mubr.f32.mxu0 0.0
        %1090 = vmatmul.mubr.f32.gmra.mrb[0].mxu0 %v880
        %v1091 = vpop.f32.mrb[0].mxu0
        %v1092 = vadd.f32 0.0, %v1091
        %v1093 = vpop.f32.mrb[0].mxu0
        %v1094 = vadd.f32 0.0, %v1093
        %1095 = vmatprep.mubr.f32.mxu0 0.0
        %1096 = vmatmul.mubr.f32.gmra.mrb[0].mxu0 %v881
        %v1097 = vpop.f32.mrb[0].mxu0
        %v1098 = vadd.f32 0.0, %v1097
        %v1099 = vpop.f32.mrb[0].mxu0
        %v1100 = vadd.f32 0.0, %v1099
        %1101 = vmatprep.mubr.f32.mxu0 0.0
        %1102 = vmatmul.mubr.f32.gmra.mrb[0].mxu0 %v882
        %v1103 = vpop.f32.mrb[0].mxu0
        %v1104 = vadd.f32 0.0, %v1103
        %v1105 = vpop.f32.mrb[0].mxu0
        %v1106 = vadd.f32 0.0, %v1105
        %1107 = vmatprep.mubr.f32.mxu0 0.0
        %1108 = vmatmul.mubr.f32.gmra.mrb[0].mxu0 %v883
        %v1109 = vpop.f32.mrb[0].mxu0
        %v1110 = vadd.f32 0.0, %v1109
        %v1111 = vpop.f32.mrb[0].mxu0
        %v1112 = vadd.f32 0.0, %v1111
        %1113 = vmatprep.mubr.f32.mxu0 0.0
        %1114 = vmatmul.mubr.f32.gmra.mrb[0].mxu0 %v884
        %v1115 = vpop.f32.mrb[0].mxu0
        %v1116 = vadd.f32 0.0, %v1115
        %v1117 = vpop.f32.mrb[0].mxu0
        %v1118 = vadd.f32 0.0, %v1117
        %1119 = vmatprep.mubr.f32.mxu0 0.0
        %1120 = vmatmul.mubr.f32.gmra.mrb[0].mxu0 %v885
        %v1121 = vpop.f32.mrb[0].mxu0
        %v1122 = vadd.f32 0.0, %v1121
        %v1123 = vpop.f32.mrb[0].mxu0
        %v1124 = vadd.f32 0.0, %v1123
        %1125 = vmatprep.mubr.f32.mxu0 0.0
        %1126 = vmatmul.mubr.f32.gmra.mrb[0].mxu0 %v886
        %v1127 = vpop.f32.mrb[0].mxu0
        %v1128 = vadd.f32 0.0, %v1127
        %v1129 = vpop.f32.mrb[0].mxu0
        %v1130 = vadd.f32 0.0, %v1129
        %1131 = vmatprep.mubr.f32.mxu0 0.0
        %1132 = vmatmul.mubr.f32.gmra.mrb[0].mxu0 %v887
        %v1133 = vpop.f32.mrb[0].mxu0
        %v1134 = vadd.f32 0.0, %v1133
        %v1135 = vpop.f32.mrb[0].mxu0
        %v1136 = vadd.f32 0.0, %v1135
        %1137 = vmatprep.mubr.f32.mxu0 0.0
        %1138 = vmatmul.mubr.f32.gmra.mrb[0].mxu0 %v888
        %v1139 = vpop.f32.mrb[0].mxu0
        %v1140 = vadd.f32 0.0, %v1139
        %v1141 = vpop.f32.mrb[0].mxu0
        %v1142 = vadd.f32 0.0, %v1141
        %1143 = vmatprep.mubr.f32.mxu0 0.0
        %1144 = vmatmul.mubr.f32.gmra.mrb[0].mxu0 %v889
        %v1145 = vpop.f32.mrb[0].mxu0
        %v1146 = vadd.f32 0.0, %v1145
        %v1147 = vpop.f32.mrb[0].mxu0
        %v1148 = vadd.f32 0.0, %v1147
        %1149 = vmatprep.mubr.f32.mxu0 0.0
        %1150 = vmatmul.mubr.f32.gmra.mrb[0].mxu0 %v890
        %v1151 = vpop.f32.mrb[0].mxu0
        %v1152 = vadd.f32 0.0, %v1151
        %v1153 = vpop.f32.mrb[0].mxu0
        %v1154 = vadd.f32 0.0, %v1153
        %1155 = vmatprep.mubr.f32.mxu0 0.0
        %1156 = vmatmul.mubr.f32.gmra.mrb[0].mxu0 %v891
        %v1157 = vpop.f32.mrb[0].mxu0
        %v1158 = vadd.f32 0.0, %v1157
        %v1159 = vpop.f32.mrb[0].mxu0
        %v1160 = vadd.f32 0.0, %v1159
        %1161 = vmatprep.mubr.f32.mxu0 0.0
        %1162 = vmatmul.mubr.f32.gmra.mrb[0].mxu0 %v892
        %v1163 = vpop.f32.mrb[0].mxu0
        %v1164 = vadd.f32 0.0, %v1163
        %v1165 = vpop.f32.mrb[0].mxu0
        %v1166 = vadd.f32 0.0, %v1165
        %1167 = vmatprep.mubr.f32.mxu0 0.0
        %1168 = vmatmul.mubr.f32.gmra.mrb[0].mxu0 %v893
        %v1169 = vpop.f32.mrb[0].mxu0
        %v1170 = vadd.f32 0.0, %v1169
        %v1171 = vpop.f32.mrb[0].mxu0
        %v1172 = vadd.f32 0.0, %v1171
        %1173 = vmatprep.mubr.f32.mxu0 0.0
        %1174 = vmatmul.mubr.f32.gmra.mrb[0].mxu0 %v894
        %v1175 = vpop.f32.mrb[0].mxu0
        %v1176 = vadd.f32 0.0, %v1175
        %v1177 = vpop.f32.mrb[0].mxu0
        %v1178 = vadd.f32 0.0, %v1177
        %1179 = vmatprep.mubr.f32.mxu0 0.0
        %1180 = vmatmul.mubr.f32.gmra.mrb[0].mxu0 %v895
        %v1181 = vpop.f32.mrb[0].mxu0
        %v1182 = vadd.f32 0.0, %v1181
        %v1183 = vpop.f32.mrb[0].mxu0
        %v1184 = vadd.f32 0.0, %v1183
        %1185 = vmatprep.mubr.f32.mxu0 0.0
        %1186 = vmatmul.mubr.f32.gmra.mrb[0].mxu0 %v896
        %v1187 = vpop.f32.mrb[0].mxu0
        %v1188 = vadd.f32 0.0, %v1187
        %v1189 = vpop.f32.mrb[0].mxu0
        %v1190 = vadd.f32 0.0, %v1189
        %1191 = vmatprep.mubr.f32.mxu0 0.0
        %1192 = vmatmul.mubr.f32.gmra.mrb[0].mxu0 %v897
        %v1193 = vpop.f32.mrb[0].mxu0
        %v1194 = vadd.f32 0.0, %v1193
        %v1195 = vpop.f32.mrb[0].mxu0
        %v1196 = vadd.f32 0.0, %v1195
        %1197 = vmatprep.mubr.f32.mxu0 0.0
        %1198 = vmatmul.mubr.f32.gmra.mrb[0].mxu0 %v898
        %v1199 = vpop.f32.mrb[0].mxu0
        %v1200 = vadd.f32 0.0, %v1199
        %v1201 = vpop.f32.mrb[0].mxu0
        %v1202 = vadd.f32 0.0, %v1201
        %1203 = vmatprep.mubr.f32.mxu0 0.0
        %1204 = vmatmul.mubr.f32.gmra.mrb[0].mxu0 %v899
        %v1205 = vpop.f32.mrb[0].mxu0
        %v1206 = vadd.f32 0.0, %v1205
        %v1207 = vpop.f32.mrb[0].mxu0
        %v1208 = vadd.f32 0.0, %v1207
        %1209 = vmatprep.mubr.f32.mxu0 0.0
        %1210 = vmatmul.mubr.f32.gmra.mrb[0].mxu0 %v900
        %v1211 = vpop.f32.mrb[0].mxu0
        %v1212 = vadd.f32 0.0, %v1211
        %v1213 = vpop.f32.mrb[0].mxu0
        %v1214 = vadd.f32 0.0, %v1213
        %1215 = vmatprep.mubr.f32.mxu0 0.0
        %1216 = vmatmul.mubr.f32.gmra.mrb[0].mxu0 %v901
        %v1217 = vpop.f32.mrb[0].mxu0
        %v1218 = vadd.f32 0.0, %v1217
        %v1219 = vpop.f32.mrb[0].mxu0
        %v1220 = vadd.f32 0.0, %v1219
        %1221 = vmatprep.mubr.f32.mxu0 0.0
        %1222 = vmatmul.mubr.f32.gmra.mrb[0].mxu0 %v902
        %v1223 = vpop.f32.mrb[0].mxu0
        %v1224 = vadd.f32 0.0, %v1223
        %v1225 = vpop.f32.mrb[0].mxu0
        %v1226 = vadd.f32 0.0, %v1225
        %1227 = vmatprep.mubr.f32.mxu0 0.0
        %1228 = vmatmul.mubr.f32.gmra.mrb[0].mxu0 %v903
        %v1229 = vpop.f32.mrb[0].mxu0
        %v1230 = vadd.f32 0.0, %v1229
        %v1231 = vpop.f32.mrb[0].mxu0
        %v1232 = vadd.f32 0.0, %v1231
        %1233 = vmatprep.mubr.f32.mxu0 0.0
        %1234 = vmatmul.mubr.f32.gmra.mrb[0].mxu0 %v904
        %v1235 = vpop.f32.mrb[0].mxu0
        %v1236 = vadd.f32 0.0, %v1235
        %v1237 = vpop.f32.mrb[0].mxu0
        %v1238 = vadd.f32 0.0, %v1237
        %1239 = vmatprep.mubr.f32.mxu0 0.0
        %1240 = vmatmul.mubr.f32.gmra.mrb[0].mxu0 %v905
        %v1241 = vpop.f32.mrb[0].mxu0
        %v1242 = vadd.f32 0.0, %v1241
        %v1243 = vpop.f32.mrb[0].mxu0
        %v1244 = vadd.f32 0.0, %v1243
        %1245 = vmatprep.mubr.f32.mxu0 0.0
        %1246 = vmatmul.mubr.f32.gmra.mrb[0].mxu0 %v906
        %v1247 = vpop.f32.mrb[0].mxu0
        %v1248 = vadd.f32 0.0, %v1247
        %v1249 = vpop.f32.mrb[0].mxu0
        %v1250 = vadd.f32 0.0, %v1249
        %1251 = vmatprep.mubr.f32.mxu0 0.0
        %1252 = vmatmul.mubr.f32.gmra.mrb[0].mxu0 %v907
        %v1253 = vpop.f32.mrb[0].mxu0
        %v1254 = vadd.f32 0.0, %v1253
        %v1255 = vpop.f32.mrb[0].mxu0
        %v1256 = vadd.f32 0.0, %v1255
        %1257 = vmatprep.mubr.f32.mxu0 0.0
        %1258 = vmatmul.mubr.f32.gmra.mrb[0].mxu0 %v908
        %v1259 = vpop.f32.mrb[0].mxu0
        %v1260 = vadd.f32 0.0, %v1259
        %v1261 = vpop.f32.mrb[0].mxu0
        %v1262 = vadd.f32 0.0, %v1261
        %1263 = vmatprep.mubr.f32.mxu0 0.0
        %1264 = vmatmul.mubr.f32.gmra.mrb[0].mxu0 %v909
        %v1265 = vpop.f32.mrb[0].mxu0
        %v1266 = vadd.f32 0.0, %v1265
        %v1267 = vpop.f32.mrb[0].mxu0
        %v1268 = vadd.f32 0.0, %v1267
        %1269 = vmatprep.mubr.f32.mxu0 0.0
        %1270 = vmatmul.mubr.f32.gmra.mrb[0].mxu0 %v910
        %v1271 = vpop.f32.mrb[0].mxu0
        %v1272 = vadd.f32 0.0, %v1271
        %v1273 = vpop.f32.mrb[0].mxu0
        %v1274 = vadd.f32 0.0, %v1273
        %1275 = vmatprep.mubr.f32.mxu0 0.0
        %1276 = vmatmul.mubr.f32.gmra.mrb[0].mxu0 %v911
        %v1277 = vpop.f32.mrb[0].mxu0
        %v1278 = vadd.f32 0.0, %v1277
        %v1279 = vpop.f32.mrb[0].mxu0
        %v1280 = vadd.f32 0.0, %v1279
        %1281 = vmatprep.mubr.f32.mxu0 0.0
        %1282 = vmatmul.mubr.f32.gmra.mrb[0].mxu0 %v912
        %v1283 = vpop.f32.mrb[0].mxu0
        %v1284 = vadd.f32 0.0, %v1283
        %v1285 = vpop.f32.mrb[0].mxu0
        %v1286 = vadd.f32 0.0, %v1285
        %1287 = vmatprep.mubr.f32.mxu0 0.0
        %1288 = vmatmul.mubr.f32.gmra.mrb[0].mxu0 %v913
        %v1289 = vpop.f32.mrb[0].mxu0
        %v1290 = vadd.f32 0.0, %v1289
        %v1291 = vpop.f32.mrb[0].mxu0
        %v1292 = vadd.f32 0.0, %v1291
        %1293 = vmatprep.mubr.f32.mxu0 0.0
        %1294 = vmatmul.mubr.f32.gmra.mrb[0].mxu0 %v914
        %v1295 = vpop.f32.mrb[0].mxu0
        %v1296 = vadd.f32 0.0, %v1295
        %v1297 = vpop.f32.mrb[0].mxu0
        %v1298 = vadd.f32 0.0, %v1297
        %1299 = vdwg.mxu0
        %1300 = vst [vmem:[#allocation2] sm:$0xff] %v1014
        %1301 = vst [vmem:[#allocation2 + $0x8] sm:$0xff] %v1020
        %1302 = vst [vmem:[#allocation2 + $0x10] sm:$0xff] %v1026
        %1303 = vst [vmem:[#allocation2 + $0x18] sm:$0xff] %v1032
        %1304 = vst [vmem:[#allocation2 + $0x20] sm:$0xff] %v1038
        %1305 = vst [vmem:[#allocation2 + $0x28] sm:$0xff] %v1044
        %1306 = vst [vmem:[#allocation2 + $0x30] sm:$0xff] %v1050
        %1307 = vst [vmem:[#allocation2 + $0x38] sm:$0xff] %v1056
        %1308 = vst [vmem:[#allocation2 + $0x40] sm:$0xff] %v1062
        %1309 = vst [vmem:[#allocation2 + $0x48] sm:$0xff] %v1068
        %1310 = vst [vmem:[#allocation2 + $0x50] sm:$0xff] %v1074
        %1311 = vst [vmem:[#allocation2 + $0x58] sm:$0xff] %v1080
        %1312 = vst [vmem:[#allocation2 + $0x60] sm:$0xff] %v1086
        %1313 = vst [vmem:[#allocation2 + $0x68] sm:$0xff] %v1092
        %1314 = vst [vmem:[#allocation2 + $0x70] sm:$0xff] %v1098
        %1315 = vst [vmem:[#allocation2 + $0x78] sm:$0xff] %v1104
        %1316 = vst [vmem:[#allocation2 + $0x80] sm:$0xff] %v1110
        %1317 = vst [vmem:[#allocation2 + $0x88] sm:$0xff] %v1116
        %1318 = vst [vmem:[#allocation2 + $0x90] sm:$0xff] %v1122
        %1319 = vst [vmem:[#allocation2 + $0x98] sm:$0xff] %v1128
        %1320 = vst [vmem:[#allocation2 + $0xa0] sm:$0xff] %v1134
        %1321 = vst [vmem:[#allocation2 + $0xa8] sm:$0xff] %v1140
        %1322 = vst [vmem:[#allocation2 + $0xb0] sm:$0xff] %v1146
        %1323 = vst [vmem:[#allocation2 + $0xb8] sm:$0xff] %v1152
        %1324 = vst [vmem:[#allocation2 + $0xc0] sm:$0xff] %v1158
        %1325 = vst [vmem:[#allocation2 + $0xc8] sm:$0xff] %v1164
        %1326 = vst [vmem:[#allocation2 + $0xd0] sm:$0xff] %v1170
        %1327 = vst [vmem:[#allocation2 + $0xd8] sm:$0xff] %v1176
        %1328 = vst [vmem:[#allocation2 + $0xe0] sm:$0xff] %v1182
        %1329 = vst [vmem:[#allocation2 + $0xe8] sm:$0xff] %v1188
        %1330 = vst [vmem:[#allocation2 + $0xf0] sm:$0xff] %v1194
        %1331 = vst [vmem:[#allocation2 + $0xf8] sm:$0xff] %v1200
        %1332 = vst [vmem:[#allocation2 + $0x100] sm:$0xff] %v1206
        %1333 = vst [vmem:[#allocation2 + $0x108] sm:$0xff] %v1212
        %1334 = vst [vmem:[#allocation2 + $0x110] sm:$0xff] %v1218
        %1335 = vst [vmem:[#allocation2 + $0x118] sm:$0xff] %v1224
        %1336 = vst [vmem:[#allocation2 + $0x120] sm:$0xff] %v1230
        %1337 = vst [vmem:[#allocation2 + $0x128] sm:$0xff] %v1236
        %1338 = vst [vmem:[#allocation2 + $0x130] sm:$0xff] %v1242
        %1339 = vst [vmem:[#allocation2 + $0x138] sm:$0xff] %v1248
        %1340 = vst [vmem:[#allocation2 + $0x140] sm:$0xff] %v1254
        %1341 = vst [vmem:[#allocation2 + $0x148] sm:$0xff] %v1260
        %1342 = vst [vmem:[#allocation2 + $0x150] sm:$0xff] %v1266
        %1343 = vst [vmem:[#allocation2 + $0x158] sm:$0xff] %v1272
        %1344 = vst [vmem:[#allocation2 + $0x160] sm:$0xff] %v1278
        %1345 = vst [vmem:[#allocation2 + $0x168] sm:$0xff] %v1284
        %1346 = vst [vmem:[#allocation2 + $0x170] sm:$0xff] %v1290
        %1347 = vst [vmem:[#allocation2 + $0x178] sm:$0xff] %v1296
        %v1348 = vld [vmem:[%s4 + $0x3] sm:$0x1]
        %v1349 = vlaneseq
        %v1350 = vshrl.u32 %v1349, 7
        %v1351 = vsub.s32 0, %v1350
        %v1352 = vrot.slane %v1348, %v1351
        %v1353 = vadd.f32 %v1016, %v1352
        %v1354 = vadd.f32 %v1022, %v1352
        %v1355 = vadd.f32 %v1028, %v1352
        %v1356 = vadd.f32 %v1034, %v1352
        %v1357 = vadd.f32 %v1040, %v1352
        %v1358 = vadd.f32 %v1046, %v1352
        %v1359 = vadd.f32 %v1052, %v1352
        %v1360 = vadd.f32 %v1058, %v1352
        %v1361 = vadd.f32 %v1064, %v1352
        %v1362 = vadd.f32 %v1070, %v1352
        %v1363 = vadd.f32 %v1076, %v1352
        %v1364 = vadd.f32 %v1082, %v1352
        %v1365 = vadd.f32 %v1088, %v1352
        %v1366 = vadd.f32 %v1094, %v1352
        %v1367 = vadd.f32 %v1100, %v1352
        %v1368 = vadd.f32 %v1106, %v1352
        %v1369 = vadd.f32 %v1112, %v1352
        %v1370 = vadd.f32 %v1118, %v1352
        %v1371 = vadd.f32 %v1124, %v1352
        %v1372 = vadd.f32 %v1130, %v1352
        %v1373 = vadd.f32 %v1136, %v1352
        %v1374 = vadd.f32 %v1142, %v1352
        %v1375 = vadd.f32 %v1148, %v1352
        %v1376 = vadd.f32 %v1154, %v1352
        %v1377 = vadd.f32 %v1160, %v1352
        %v1378 = vadd.f32 %v1166, %v1352
        %v1379 = vadd.f32 %v1172, %v1352
        %v1380 = vadd.f32 %v1178, %v1352
        %v1381 = vadd.f32 %v1184, %v1352
        %v1382 = vadd.f32 %v1190, %v1352
        %v1383 = vadd.f32 %v1196, %v1352
        %v1384 = vadd.f32 %v1202, %v1352
        %v1385 = vadd.f32 %v1208, %v1352
        %v1386 = vadd.f32 %v1214, %v1352
        %v1387 = vadd.f32 %v1220, %v1352
        %v1388 = vadd.f32 %v1226, %v1352
        %v1389 = vadd.f32 %v1232, %v1352
        %v1390 = vadd.f32 %v1238, %v1352
        %v1391 = vadd.f32 %v1244, %v1352
        %v1392 = vadd.f32 %v1250, %v1352
        %v1393 = vadd.f32 %v1256, %v1352
        %v1394 = vadd.f32 %v1262, %v1352
        %v1395 = vadd.f32 %v1268, %v1352
        %v1396 = vadd.f32 %v1274, %v1352
        %v1397 = vadd.f32 %v1280, %v1352
        %v1398 = vadd.f32 %v1286, %v1352
        %v1399 = vadd.f32 %v1292, %v1352
        %v1400 = vadd.f32 %v1298, %v1352
        %1401 = vst [vmem:[#allocation3] sm:$0xff] %v1353
        %1402 = vst [vmem:[#allocation3 + $0x8] sm:$0xff] %v1354
        %1403 = vst [vmem:[#allocation3 + $0x10] sm:$0xff] %v1355
        %1404 = vst [vmem:[#allocation3 + $0x18] sm:$0xff] %v1356
        %1405 = vst [vmem:[#allocation3 + $0x20] sm:$0xff] %v1357
        %1406 = vst [vmem:[#allocation3 + $0x28] sm:$0xff] %v1358
        %1407 = vst [vmem:[#allocation3 + $0x30] sm:$0xff] %v1359
        %1408 = vst [vmem:[#allocation3 + $0x38] sm:$0xff] %v1360
        %1409 = vst [vmem:[#allocation3 + $0x40] sm:$0xff] %v1361
        %1410 = vst [vmem:[#allocation3 + $0x48] sm:$0xff] %v1362
        %1411 = vst [vmem:[#allocation3 + $0x50] sm:$0xff] %v1363
        %1412 = vst [vmem:[#allocation3 + $0x58] sm:$0xff] %v1364
        %1413 = vst [vmem:[#allocation3 + $0x60] sm:$0xff] %v1365
        %1414 = vst [vmem:[#allocation3 + $0x68] sm:$0xff] %v1366
        %1415 = vst [vmem:[#allocation3 + $0x70] sm:$0xff] %v1367
        %1416 = vst [vmem:[#allocation3 + $0x78] sm:$0xff] %v1368
        %1417 = vst [vmem:[#allocation3 + $0x80] sm:$0xff] %v1369
        %1418 = vst [vmem:[#allocation3 + $0x88] sm:$0xff] %v1370
        %1419 = vst [vmem:[#allocation3 + $0x90] sm:$0xff] %v1371
        %1420 = vst [vmem:[#allocation3 + $0x98] sm:$0xff] %v1372
        %1421 = vst [vmem:[#allocation3 + $0xa0] sm:$0xff] %v1373
        %1422 = vst [vmem:[#allocation3 + $0xa8] sm:$0xff] %v1374
        %1423 = vst [vmem:[#allocation3 + $0xb0] sm:$0xff] %v1375
        %1424 = vst [vmem:[#allocation3 + $0xb8] sm:$0xff] %v1376
        %1425 = vst [vmem:[#allocation3 + $0xc0] sm:$0xff] %v1377
        %1426 = vst [vmem:[#allocation3 + $0xc8] sm:$0xff] %v1378
        %1427 = vst [vmem:[#allocation3 + $0xd0] sm:$0xff] %v1379
        %1428 = vst [vmem:[#allocation3 + $0xd8] sm:$0xff] %v1380
        %1429 = vst [vmem:[#allocation3 + $0xe0] sm:$0xff] %v1381
        %1430 = vst [vmem:[#allocation3 + $0xe8] sm:$0xff] %v1382
        %1431 = vst [vmem:[#allocation3 + $0xf0] sm:$0xff] %v1383
        %1432 = vst [vmem:[#allocation3 + $0xf8] sm:$0xff] %v1384
        %1433 = vst [vmem:[#allocation3 + $0x100] sm:$0xff] %v1385
        %1434 = vst [vmem:[#allocation3 + $0x108] sm:$0xff] %v1386
        %1435 = vst [vmem:[#allocation3 + $0x110] sm:$0xff] %v1387
        %1436 = vst [vmem:[#allocation3 + $0x118] sm:$0xff] %v1388
        %1437 = vst [vmem:[#allocation3 + $0x120] sm:$0xff] %v1389
        %1438 = vst [vmem:[#allocation3 + $0x128] sm:$0xff] %v1390
        %1439 = vst [vmem:[#allocation3 + $0x130] sm:$0xff] %v1391
        %1440 = vst [vmem:[#allocation3 + $0x138] sm:$0xff] %v1392
        %1441 = vst [vmem:[#allocation3 + $0x140] sm:$0xff] %v1393
        %1442 = vst [vmem:[#allocation3 + $0x148] sm:$0xff] %v1394
        %1443 = vst [vmem:[#allocation3 + $0x150] sm:$0xff] %v1395
        %1444 = vst [vmem:[#allocation3 + $0x158] sm:$0xff] %v1396
        %1445 = vst [vmem:[#allocation3 + $0x160] sm:$0xff] %v1397
        %1446 = vst [vmem:[#allocation3 + $0x168] sm:$0xff] %v1398
        %1447 = vst [vmem:[#allocation3 + $0x170] sm:$0xff] %v1399
        %1448 = vst [vmem:[#allocation3 + $0x178] sm:$0xff] %v1400
      $region48: #{residual_gcn_forward.1} parent=39 // pred_fallthru
        _
      // Predicated region
      $region49: #{residual_gcn_forward.1} parent=39 // pred_check
        %p1449 = pneg %p272
      $region50: #{residual_gcn_forward.1} parent=39 // pred_check_branch
        %1451 = sbr.rel (%p1449) target = $region52
      $region51: #{residual_gcn_forward.1} parent=39 // pred_region
        %v1452 = vld [vmem:[%s4] sm:$0xf]
        %s1453 = scalar_select %p275, 1, 0
        %v1454 = vstv %s1453
        %vm1455 = vcmp.eq.s32.totalorder %v1454, 1
        %v1457 = vrot.slane %v1452, 7
        %v1458 = vrot.slane %v1457, 2
        %v1460 = vsel %vm1455, %v1452, %v1458
        %v1461 = vlaneseq
        %v1462 = vshrl.u32 %v1461, 7
        %v1463 = vsub.s32 0, %v1462
        %v1464 = vrot.slane %v1460, %v1463
        %1465 = vst [vmem:[#allocation5] sm:$0xff] %v1464
        %1466 = vst [vmem:[#allocation5 + $0x8] sm:$0xff] %v1464
        %1467 = vst [vmem:[#allocation5 + $0x10] sm:$0xff] %v1464
        %1468 = vst [vmem:[#allocation5 + $0x18] sm:$0xff] %v1464
        %1469 = vst [vmem:[#allocation5 + $0x20] sm:$0xff] %v1464
        %1470 = vst [vmem:[#allocation5 + $0x28] sm:$0xff] %v1464
        %1471 = vst [vmem:[#allocation5 + $0x30] sm:$0xff] %v1464
        %1472 = vst [vmem:[#allocation5 + $0x38] sm:$0xff] %v1464
        %1473 = vst [vmem:[#allocation5 + $0x40] sm:$0xff] %v1464
        %1474 = vst [vmem:[#allocation5 + $0x48] sm:$0xff] %v1464
        %1475 = vst [vmem:[#allocation5 + $0x50] sm:$0xff] %v1464
        %1476 = vst [vmem:[#allocation5 + $0x58] sm:$0xff] %v1464
        %1477 = vst [vmem:[#allocation5 + $0x60] sm:$0xff] %v1464
        %1478 = vst [vmem:[#allocation5 + $0x68] sm:$0xff] %v1464
        %1479 = vst [vmem:[#allocation5 + $0x70] sm:$0xff] %v1464
        %1480 = vst [vmem:[#allocation5 + $0x78] sm:$0xff] %v1464
      $region52: #{residual_gcn_forward.1} parent=39 // pred_fallthru
        _
      %s1481 = smul.u32 %s23, 384
      %v1482 = vld [vmem:[#allocation5] sm:$0xff]
      %v1483 = vld [vmem:[#allocation5 + $0x8] sm:$0xff]
      %v1484 = vld [vmem:[#allocation5 + $0x10] sm:$0xff]
      %v1485 = vld [vmem:[#allocation5 + $0x18] sm:$0xff]
      %v1486 = vld [vmem:[#allocation5 + $0x20] sm:$0xff]
      %v1487 = vld [vmem:[#allocation5 + $0x28] sm:$0xff]
      %v1488 = vld [vmem:[#allocation5 + $0x30] sm:$0xff]
      %v1489 = vld [vmem:[#allocation5 + $0x38] sm:$0xff]
      %v1490 = vld [vmem:[#allocation5 + $0x40] sm:$0xff]
      %v1491 = vld [vmem:[#allocation5 + $0x48] sm:$0xff]
      %v1492 = vld [vmem:[#allocation5 + $0x50] sm:$0xff]
      %v1493 = vld [vmem:[#allocation5 + $0x58] sm:$0xff]
      %v1494 = vld [vmem:[#allocation5 + $0x60] sm:$0xff]
      %v1495 = vld [vmem:[#allocation5 + $0x68] sm:$0xff]
      %v1496 = vld [vmem:[#allocation5 + $0x70] sm:$0xff]
      %v1497 = vld [vmem:[#allocation5 + $0x78] sm:$0xff]
      %v1498 = vld [vmem:[%s260] sm:$0xff]
      %v1499 = vld [vmem:[%s260 + $0x8] sm:$0xff]
      %v1500 = vld [vmem:[%s260 + $0x10] sm:$0xff]
      %v1501 = vld [vmem:[%s260 + $0x18] sm:$0xff]
      %v1502 = vld [vmem:[%s260 + $0x20] sm:$0xff]
      %v1503 = vld [vmem:[%s260 + $0x28] sm:$0xff]
      %v1504 = vld [vmem:[%s260 + $0x30] sm:$0xff]
      %v1505 = vld [vmem:[%s260 + $0x38] sm:$0xff]
      %v1506 = vld [vmem:[%s260 + $0x40] sm:$0xff]
      %v1507 = vld [vmem:[%s260 + $0x48] sm:$0xff]
      %v1508 = vld [vmem:[%s260 + $0x50] sm:$0xff]
      %v1509 = vld [vmem:[%s260 + $0x58] sm:$0xff]
      %v1510 = vld [vmem:[%s260 + $0x60] sm:$0xff]
      %v1511 = vld [vmem:[%s260 + $0x68] sm:$0xff]
      %v1512 = vld [vmem:[%s260 + $0x70] sm:$0xff]
      %v1513 = vld [vmem:[%s260 + $0x78] sm:$0xff]
      %v1514 = vld [vmem:[%s260 + $0x80] sm:$0xff]
      %v1515 = vld [vmem:[%s260 + $0x88] sm:$0xff]
      %v1516 = vld [vmem:[%s260 + $0x90] sm:$0xff]
      %v1517 = vld [vmem:[%s260 + $0x98] sm:$0xff]
      %v1518 = vld [vmem:[%s260 + $0xa0] sm:$0xff]
      %v1519 = vld [vmem:[%s260 + $0xa8] sm:$0xff]
      %v1520 = vld [vmem:[%s260 + $0xb0] sm:$0xff]
      %v1521 = vld [vmem:[%s260 + $0xb8] sm:$0xff]
      %v1522 = vld [vmem:[%s260 + $0xc0] sm:$0xff]
      %v1523 = vld [vmem:[%s260 + $0xc8] sm:$0xff]
      %v1524 = vld [vmem:[%s260 + $0xd0] sm:$0xff]
      %v1525 = vld [vmem:[%s260 + $0xd8] sm:$0xff]
      %v1526 = vld [vmem:[%s260 + $0xe0] sm:$0xff]
      %v1527 = vld [vmem:[%s260 + $0xe8] sm:$0xff]
      %v1528 = vld [vmem:[%s260 + $0xf0] sm:$0xff]
      %v1529 = vld [vmem:[%s260 + $0xf8] sm:$0xff]
      %v1530 = vld [vmem:[%s260 + $0x100] sm:$0xff]
      %v1531 = vld [vmem:[%s260 + $0x108] sm:$0xff]
      %v1532 = vld [vmem:[%s260 + $0x110] sm:$0xff]
      %v1533 = vld [vmem:[%s260 + $0x118] sm:$0xff]
      %v1534 = vld [vmem:[%s260 + $0x120] sm:$0xff]
      %v1535 = vld [vmem:[%s260 + $0x128] sm:$0xff]
      %v1536 = vld [vmem:[%s260 + $0x130] sm:$0xff]
      %v1537 = vld [vmem:[%s260 + $0x138] sm:$0xff]
      %v1538 = vld [vmem:[%s260 + $0x140] sm:$0xff]
      %v1539 = vld [vmem:[%s260 + $0x148] sm:$0xff]
      %v1540 = vld [vmem:[%s260 + $0x150] sm:$0xff]
      %v1541 = vld [vmem:[%s260 + $0x158] sm:$0xff]
      %v1542 = vld [vmem:[%s260 + $0x160] sm:$0xff]
      %v1543 = vld [vmem:[%s260 + $0x168] sm:$0xff]
      %v1544 = vld [vmem:[%s260 + $0x170] sm:$0xff]
      %v1545 = vld [vmem:[%s260 + $0x178] sm:$0xff]
      %s1546 = scalar_lea.vmem [#allocation2], %s1481
      %v1547 = vld [vmem:[%s1546] sm:$0xff]
      %v1548 = vld [vmem:[%s1546 + $0x8] sm:$0xff]
      %v1549 = vld [vmem:[%s1546 + $0x10] sm:$0xff]
      %v1550 = vld [vmem:[%s1546 + $0x18] sm:$0xff]
      %v1551 = vld [vmem:[%s1546 + $0x20] sm:$0xff]
      %v1552 = vld [vmem:[%s1546 + $0x28] sm:$0xff]
      %v1553 = vld [vmem:[%s1546 + $0x30] sm:$0xff]
      %v1554 = vld [vmem:[%s1546 + $0x38] sm:$0xff]
      %v1555 = vld [vmem:[%s1546 + $0x40] sm:$0xff]
      %v1556 = vld [vmem:[%s1546 + $0x48] sm:$0xff]
      %v1557 = vld [vmem:[%s1546 + $0x50] sm:$0xff]
      %v1558 = vld [vmem:[%s1546 + $0x58] sm:$0xff]
      %v1559 = vld [vmem:[%s1546 + $0x60] sm:$0xff]
      %v1560 = vld [vmem:[%s1546 + $0x68] sm:$0xff]
      %v1561 = vld [vmem:[%s1546 + $0x70] sm:$0xff]
      %v1562 = vld [vmem:[%s1546 + $0x78] sm:$0xff]
      %v1563 = vld [vmem:[%s1546 + $0x80] sm:$0xff]
      %v1564 = vld [vmem:[%s1546 + $0x88] sm:$0xff]
      %v1565 = vld [vmem:[%s1546 + $0x90] sm:$0xff]
      %v1566 = vld [vmem:[%s1546 + $0x98] sm:$0xff]
      %v1567 = vld [vmem:[%s1546 + $0xa0] sm:$0xff]
      %v1568 = vld [vmem:[%s1546 + $0xa8] sm:$0xff]
      %v1569 = vld [vmem:[%s1546 + $0xb0] sm:$0xff]
      %v1570 = vld [vmem:[%s1546 + $0xb8] sm:$0xff]
      %v1571 = vld [vmem:[%s1546 + $0xc0] sm:$0xff]
      %v1572 = vld [vmem:[%s1546 + $0xc8] sm:$0xff]
      %v1573 = vld [vmem:[%s1546 + $0xd0] sm:$0xff]
      %v1574 = vld [vmem:[%s1546 + $0xd8] sm:$0xff]
      %v1575 = vld [vmem:[%s1546 + $0xe0] sm:$0xff]
      %v1576 = vld [vmem:[%s1546 + $0xe8] sm:$0xff]
      %v1577 = vld [vmem:[%s1546 + $0xf0] sm:$0xff]
      %v1578 = vld [vmem:[%s1546 + $0xf8] sm:$0xff]
      %v1579 = vld [vmem:[%s1546 + $0x100] sm:$0xff]
      %v1580 = vld [vmem:[%s1546 + $0x108] sm:$0xff]
      %v1581 = vld [vmem:[%s1546 + $0x110] sm:$0xff]
      %v1582 = vld [vmem:[%s1546 + $0x118] sm:$0xff]
      %v1583 = vld [vmem:[%s1546 + $0x120] sm:$0xff]
      %v1584 = vld [vmem:[%s1546 + $0x128] sm:$0xff]
      %v1585 = vld [vmem:[%s1546 + $0x130] sm:$0xff]
      %v1586 = vld [vmem:[%s1546 + $0x138] sm:$0xff]
      %v1587 = vld [vmem:[%s1546 + $0x140] sm:$0xff]
      %v1588 = vld [vmem:[%s1546 + $0x148] sm:$0xff]
      %v1589 = vld [vmem:[%s1546 + $0x150] sm:$0xff]
      %v1590 = vld [vmem:[%s1546 + $0x158] sm:$0xff]
      %v1591 = vld [vmem:[%s1546 + $0x160] sm:$0xff]
      %v1592 = vld [vmem:[%s1546 + $0x168] sm:$0xff]
      %v1593 = vld [vmem:[%s1546 + $0x170] sm:$0xff]
      %v1594 = vld [vmem:[%s1546 + $0x178] sm:$0xff]
      %1595 = vmatprep.subr.mxu0 0.0
      %1596 = vmatpush1.msra.mxu0 %v1547
      %1597 = vmatprep.subr.mxu0 0.0
      %1598 = vmatpush1.msra.mxu0 %v1548
      %1599 = vmatprep.subr.mxu0 0.0
      %1600 = vmatpush1.msra.mxu0 %v1549
      %1601 = vmatprep.subr.mxu0 0.0
      %1602 = vmatpush1.msra.mxu0 %v1550
      %1603 = vmatprep.subr.mxu0 0.0
      %1604 = vmatpush1.msra.mxu0 %v1551
      %1605 = vmatprep.subr.mxu0 0.0
      %1606 = vmatpush1.msra.mxu0 %v1552
      %1607 = vmatprep.subr.mxu0 0.0
      %1608 = vmatpush1.msra.mxu0 %v1553
      %1609 = vmatprep.subr.mxu0 0.0
      %1610 = vmatpush1.msra.mxu0 %v1554
      %1611 = vmatprep.subr.mxu0 0.0
      %1612 = vmatpush1.msra.mxu0 %v1555
      %1613 = vmatprep.subr.mxu0 0.0
      %1614 = vmatpush1.msra.mxu0 %v1556
      %1615 = vmatprep.subr.mxu0 0.0
      %1616 = vmatpush1.msra.mxu0 %v1557
      %1617 = vmatprep.subr.mxu0 0.0
      %1618 = vmatpush1.msra.mxu0 %v1558
      %1619 = vmatprep.subr.mxu0 0.0
      %1620 = vmatpush1.msra.mxu0 %v1559
      %1621 = vmatprep.subr.mxu0 0.0
      %1622 = vmatpush1.msra.mxu0 %v1560
      %1623 = vmatprep.subr.mxu0 0.0
      %1624 = vmatpush1.msra.mxu0 %v1561
      %1625 = vmatprep.subr.mxu0 0.0
      %1626 = vmatpush1.msra.mxu0 %v1562
      %1627 = vmatprep.subr.mxu0 0.0
      %1628 = vmatpush1.msra.mxu0 %v1563
      %1629 = vmatprep.subr.mxu0 0.0
      %1630 = vmatpush1.msra.mxu0 %v1564
      %1631 = vmatprep.subr.mxu0 0.0
      %1632 = vmatpush1.msra.mxu0 %v1565
      %1633 = vmatprep.subr.mxu0 0.0
      %1634 = vmatpush1.msra.mxu0 %v1566
      %1635 = vmatprep.subr.mxu0 0.0
      %1636 = vmatpush1.msra.mxu0 %v1567
      %1637 = vmatprep.subr.mxu0 0.0
      %1638 = vmatpush1.msra.mxu0 %v1568
      %1639 = vmatprep.subr.mxu0 0.0
      %1640 = vmatpush1.msra.mxu0 %v1569
      %1641 = vmatprep.subr.mxu0 0.0
      %1642 = vmatpush1.msra.mxu0 %v1570
      %1643 = vmatprep.subr.mxu0 0.0
      %1644 = vmatpush1.msra.mxu0 %v1571
      %1645 = vmatprep.subr.mxu0 0.0
      %1646 = vmatpush1.msra.mxu0 %v1572
      %1647 = vmatprep.subr.mxu0 0.0
      %1648 = vmatpush1.msra.mxu0 %v1573
      %1649 = vmatprep.subr.mxu0 0.0
      %1650 = vmatpush1.msra.mxu0 %v1574
      %1651 = vmatprep.subr.mxu0 0.0
      %1652 = vmatpush1.msra.mxu0 %v1575
      %1653 = vmatprep.subr.mxu0 0.0
      %1654 = vmatpush1.msra.mxu0 %v1576
      %1655 = vmatprep.subr.mxu0 0.0
      %1656 = vmatpush1.msra.mxu0 %v1577
      %1657 = vmatprep.subr.mxu0 0.0
      %1658 = vmatpush1.msra.mxu0 %v1578
      %1659 = vmatprep.mubr.f32.mxu0 %v1499
      %1660 = vmatmul.mubr.f32.gmra.mrb[0].mxu0 %v1498
      %v1661 = vpop.f32.mrb[0].mxu0
      %v1662 = vadd.f32 0.0, %v1661
      %v1663 = vpop.f32.mrb[0].mxu0
      %1664 = vmatprep.mubr.f32.mxu0 %v1502
      %1665 = vmatmul.mubr.f32.gmra.mrb[0].mxu0 %v1501
      %v1666 = vpop.f32.mrb[0].mxu0
      %v1667 = vadd.f32 0.0, %v1666
      %v1668 = vpop.f32.mrb[0].mxu0
      %1669 = vmatprep.mubr.f32.mxu0 %v1505
      %1670 = vmatmul.mubr.f32.gmra.mrb[0].mxu0 %v1504
      %v1671 = vpop.f32.mrb[0].mxu0
      %v1672 = vadd.f32 0.0, %v1671
      %v1673 = vpop.f32.mrb[0].mxu0
      %1674 = vmatprep.mubr.f32.mxu0 %v1508
      %1675 = vmatmul.mubr.f32.gmra.mrb[0].mxu0 %v1507
      %v1676 = vpop.f32.mrb[0].mxu0
      %v1677 = vadd.f32 0.0, %v1676
      %v1678 = vpop.f32.mrb[0].mxu0
      %1679 = vmatprep.mubr.f32.mxu0 %v1511
      %1680 = vmatmul.mubr.f32.gmra.mrb[0].mxu0 %v1510
      %v1681 = vpop.f32.mrb[0].mxu0
      %v1682 = vadd.f32 0.0, %v1681
      %v1683 = vpop.f32.mrb[0].mxu0
      %1684 = vmatprep.mubr.f32.mxu0 %v1514
      %1685 = vmatmul.mubr.f32.gmra.mrb[0].mxu0 %v1513
      %v1686 = vpop.f32.mrb[0].mxu0
      %v1687 = vadd.f32 0.0, %v1686
      %v1688 = vpop.f32.mrb[0].mxu0
      %1689 = vmatprep.mubr.f32.mxu0 %v1517
      %1690 = vmatmul.mubr.f32.gmra.mrb[0].mxu0 %v1516
      %v1691 = vpop.f32.mrb[0].mxu0
      %v1692 = vadd.f32 0.0, %v1691
      %v1693 = vpop.f32.mrb[0].mxu0
      %1694 = vmatprep.mubr.f32.mxu0 %v1520
      %1695 = vmatmul.mubr.f32.gmra.mrb[0].mxu0 %v1519
      %v1696 = vpop.f32.mrb[0].mxu0
      %v1697 = vadd.f32 0.0, %v1696
      %v1698 = vpop.f32.mrb[0].mxu0
      %1699 = vmatprep.mubr.f32.mxu0 %v1523
      %1700 = vmatmul.mubr.f32.gmra.mrb[0].mxu0 %v1522
      %v1701 = vpop.f32.mrb[0].mxu0
      %v1702 = vadd.f32 0.0, %v1701
      %v1703 = vpop.f32.mrb[0].mxu0
      %1704 = vmatprep.mubr.f32.mxu0 %v1526
      %1705 = vmatmul.mubr.f32.gmra.mrb[0].mxu0 %v1525
      %v1706 = vpop.f32.mrb[0].mxu0
      %v1707 = vadd.f32 0.0, %v1706
      %v1708 = vpop.f32.mrb[0].mxu0
      %1709 = vmatprep.mubr.f32.mxu0 %v1529
      %1710 = vmatmul.mubr.f32.gmra.mrb[0].mxu0 %v1528
      %v1711 = vpop.f32.mrb[0].mxu0
      %v1712 = vadd.f32 0.0, %v1711
      %v1713 = vpop.f32.mrb[0].mxu0
      %1714 = vmatprep.mubr.f32.mxu0 %v1532
      %1715 = vmatmul.mubr.f32.gmra.mrb[0].mxu0 %v1531
      %v1716 = vpop.f32.mrb[0].mxu0
      %v1717 = vadd.f32 0.0, %v1716
      %v1718 = vpop.f32.mrb[0].mxu0
      %1719 = vmatprep.mubr.f32.mxu0 %v1535
      %1720 = vmatmul.mubr.f32.gmra.mrb[0].mxu0 %v1534
      %v1721 = vpop.f32.mrb[0].mxu0
      %v1722 = vadd.f32 0.0, %v1721
      %v1723 = vpop.f32.mrb[0].mxu0
      %1724 = vmatprep.mubr.f32.mxu0 %v1538
      %1725 = vmatmul.mubr.f32.gmra.mrb[0].mxu0 %v1537
      %v1726 = vpop.f32.mrb[0].mxu0
      %v1727 = vadd.f32 0.0, %v1726
      %v1728 = vpop.f32.mrb[0].mxu0
      %1729 = vmatprep.mubr.f32.mxu0 %v1541
      %1730 = vmatmul.mubr.f32.gmra.mrb[0].mxu0 %v1540
      %v1731 = vpop.f32.mrb[0].mxu0
      %v1732 = vadd.f32 0.0, %v1731
      %v1733 = vpop.f32.mrb[0].mxu0
      %1734 = vmatprep.mubr.f32.mxu0 %v1544
      %1735 = vmatmul.mubr.f32.gmra.mrb[0].mxu0 %v1543
      %v1736 = vpop.f32.mrb[0].mxu0
      %v1737 = vadd.f32 0.0, %v1736
      %v1738 = vpop.f32.mrb[0].mxu0
      %1739 = vdwg.mxu0
      %1740 = vmatprep.subr.mxu0 0.0
      %1741 = vmatpush1.msra.mxu0 %v1579
      %1742 = vmatprep.subr.mxu0 0.0
      %1743 = vmatpush1.msra.mxu0 %v1580
      %1744 = vmatprep.subr.mxu0 0.0
      %1745 = vmatpush1.msra.mxu0 %v1581
      %1746 = vmatprep.subr.mxu0 0.0
      %1747 = vmatpush1.msra.mxu0 %v1582
      %1748 = vmatprep.subr.mxu0 0.0
      %1749 = vmatpush1.msra.mxu0 %v1583
      %1750 = vmatprep.subr.mxu0 0.0
      %1751 = vmatpush1.msra.mxu0 %v1584
      %1752 = vmatprep.subr.mxu0 0.0
      %1753 = vmatpush1.msra.mxu0 %v1585
      %1754 = vmatprep.subr.mxu0 0.0
      %1755 = vmatpush1.msra.mxu0 %v1586
      %1756 = vmatprep.subr.mxu0 0.0
      %1757 = vmatpush1.msra.mxu0 %v1587
      %1758 = vmatprep.subr.mxu0 0.0
      %1759 = vmatpush1.msra.mxu0 %v1588
      %1760 = vmatprep.subr.mxu0 0.0
      %1761 = vmatpush1.msra.mxu0 %v1589
      %1762 = vmatprep.subr.mxu0 0.0
      %1763 = vmatpush1.msra.mxu0 %v1590
      %1764 = vmatprep.subr.mxu0 0.0
      %1765 = vmatpush1.msra.mxu0 %v1591
      %1766 = vmatprep.subr.mxu0 0.0
      %1767 = vmatpush1.msra.mxu0 %v1592
      %1768 = vmatprep.subr.mxu0 0.0
      %1769 = vmatpush1.msra.mxu0 %v1593
      %1770 = vmatprep.subr.mxu0 0.0
      %1771 = vmatpush1.msra.mxu0 %v1594
      %1772 = vmatprep.subr.mxu0 0.0
      %1773 = vmatpush1.msra.mxu0 0.0
      %1774 = vmatprep.subr.mxu0 0.0
      %1775 = vmatpush1.msra.mxu0 0.0
      %1776 = vmatprep.subr.mxu0 0.0
      %1777 = vmatpush1.msra.mxu0 0.0
      %1778 = vmatprep.subr.mxu0 0.0
      %1779 = vmatpush1.msra.mxu0 0.0
      %1780 = vmatprep.subr.mxu0 0.0
      %1781 = vmatpush1.msra.mxu0 0.0
      %1782 = vmatprep.subr.mxu0 0.0
      %1783 = vmatpush1.msra.mxu0 0.0
      %1784 = vmatprep.subr.mxu0 0.0
      %1785 = vmatpush1.msra.mxu0 0.0
      %1786 = vmatprep.subr.mxu0 0.0
      %1787 = vmatpush1.msra.mxu0 0.0
      %1788 = vmatprep.subr.mxu0 0.0
      %1789 = vmatpush1.msra.mxu0 0.0
      %1790 = vmatprep.subr.mxu0 0.0
      %1791 = vmatpush1.msra.mxu0 0.0
      %1792 = vmatprep.subr.mxu0 0.0
      %1793 = vmatpush1.msra.mxu0 0.0
      %1794 = vmatprep.subr.mxu0 0.0
      %1795 = vmatpush1.msra.mxu0 0.0
      %1796 = vmatprep.subr.mxu0 0.0
      %1797 = vmatpush1.msra.mxu0 0.0
      %1798 = vmatprep.subr.mxu0 0.0
      %1799 = vmatpush1.msra.mxu0 0.0
      %1800 = vmatprep.subr.mxu0 0.0
      %1801 = vmatpush1.msra.mxu0 0.0
      %1802 = vmatprep.subr.mxu0 0.0
      %1803 = vmatpush1.msra.mxu0 0.0
      %1804 = vmatprep.mubr.f32.mxu0 0.0
      %1805 = vmatmul.mubr.f32.gmra.mrb[0].mxu0 %v1500
      %v1806 = vpop.f32.mrb[0].mxu0
      %v1807 = vadd.f32 %v1662, %v1806
      %v1808 = vpop.f32.mrb[0].mxu0
      %1809 = vmatprep.mubr.f32.mxu0 0.0
      %1810 = vmatmul.mubr.f32.gmra.mrb[0].mxu0 %v1503
      %v1811 = vpop.f32.mrb[0].mxu0
      %v1812 = vadd.f32 %v1667, %v1811
      %v1813 = vpop.f32.mrb[0].mxu0
      %1814 = vmatprep.mubr.f32.mxu0 0.0
      %1815 = vmatmul.mubr.f32.gmra.mrb[0].mxu0 %v1506
      %v1816 = vpop.f32.mrb[0].mxu0
      %v1817 = vadd.f32 %v1672, %v1816
      %v1818 = vpop.f32.mrb[0].mxu0
      %1819 = vmatprep.mubr.f32.mxu0 0.0
      %1820 = vmatmul.mubr.f32.gmra.mrb[0].mxu0 %v1509
      %v1821 = vpop.f32.mrb[0].mxu0
      %v1822 = vadd.f32 %v1677, %v1821
      %v1823 = vpop.f32.mrb[0].mxu0
      %1824 = vmatprep.mubr.f32.mxu0 0.0
      %1825 = vmatmul.mubr.f32.gmra.mrb[0].mxu0 %v1512
      %v1826 = vpop.f32.mrb[0].mxu0
      %v1827 = vadd.f32 %v1682, %v1826
      %v1828 = vpop.f32.mrb[0].mxu0
      %1829 = vmatprep.mubr.f32.mxu0 0.0
      %1830 = vmatmul.mubr.f32.gmra.mrb[0].mxu0 %v1515
      %v1831 = vpop.f32.mrb[0].mxu0
      %v1832 = vadd.f32 %v1687, %v1831
      %v1833 = vpop.f32.mrb[0].mxu0
      %1834 = vmatprep.mubr.f32.mxu0 0.0
      %1835 = vmatmul.mubr.f32.gmra.mrb[0].mxu0 %v1518
      %v1836 = vpop.f32.mrb[0].mxu0
      %v1837 = vadd.f32 %v1692, %v1836
      %v1838 = vpop.f32.mrb[0].mxu0
      %1839 = vmatprep.mubr.f32.mxu0 0.0
      %1840 = vmatmul.mubr.f32.gmra.mrb[0].mxu0 %v1521
      %v1841 = vpop.f32.mrb[0].mxu0
      %v1842 = vadd.f32 %v1697, %v1841
      %v1843 = vpop.f32.mrb[0].mxu0
      %1844 = vmatprep.mubr.f32.mxu0 0.0
      %1845 = vmatmul.mubr.f32.gmra.mrb[0].mxu0 %v1524
      %v1846 = vpop.f32.mrb[0].mxu0
      %v1847 = vadd.f32 %v1702, %v1846
      %v1848 = vpop.f32.mrb[0].mxu0
      %1849 = vmatprep.mubr.f32.mxu0 0.0
      %1850 = vmatmul.mubr.f32.gmra.mrb[0].mxu0 %v1527
      %v1851 = vpop.f32.mrb[0].mxu0
      %v1852 = vadd.f32 %v1707, %v1851
      %v1853 = vpop.f32.mrb[0].mxu0
      %1854 = vmatprep.mubr.f32.mxu0 0.0
      %1855 = vmatmul.mubr.f32.gmra.mrb[0].mxu0 %v1530
      %v1856 = vpop.f32.mrb[0].mxu0
      %v1857 = vadd.f32 %v1712, %v1856
      %v1858 = vpop.f32.mrb[0].mxu0
      %1859 = vmatprep.mubr.f32.mxu0 0.0
      %1860 = vmatmul.mubr.f32.gmra.mrb[0].mxu0 %v1533
      %v1861 = vpop.f32.mrb[0].mxu0
      %v1862 = vadd.f32 %v1717, %v1861
      %v1863 = vpop.f32.mrb[0].mxu0
      %1864 = vmatprep.mubr.f32.mxu0 0.0
      %1865 = vmatmul.mubr.f32.gmra.mrb[0].mxu0 %v1536
      %v1866 = vpop.f32.mrb[0].mxu0
      %v1867 = vadd.f32 %v1722, %v1866
      %v1868 = vpop.f32.mrb[0].mxu0
      %1869 = vmatprep.mubr.f32.mxu0 0.0
      %1870 = vmatmul.mubr.f32.gmra.mrb[0].mxu0 %v1539
      %v1871 = vpop.f32.mrb[0].mxu0
      %v1872 = vadd.f32 %v1727, %v1871
      %v1873 = vpop.f32.mrb[0].mxu0
      %1874 = vmatprep.mubr.f32.mxu0 0.0
      %1875 = vmatmul.mubr.f32.gmra.mrb[0].mxu0 %v1542
      %v1876 = vpop.f32.mrb[0].mxu0
      %v1877 = vadd.f32 %v1732, %v1876
      %v1878 = vpop.f32.mrb[0].mxu0
      %1879 = vmatprep.mubr.f32.mxu0 0.0
      %1880 = vmatmul.mubr.f32.gmra.mrb[0].mxu0 %v1545
      %v1881 = vpop.f32.mrb[0].mxu0
      %v1882 = vadd.f32 %v1737, %v1881
      %v1883 = vpop.f32.mrb[0].mxu0
      %1884 = vdwg.mxu0
      %v1885 = vadd.f32 %v1482, %v1807
      %v1886 = vadd.f32 %v1483, %v1812
      %v1887 = vadd.f32 %v1484, %v1817
      %v1888 = vadd.f32 %v1485, %v1822
      %v1889 = vadd.f32 %v1486, %v1827
      %v1890 = vadd.f32 %v1487, %v1832
      %v1891 = vadd.f32 %v1488, %v1837
      %v1892 = vadd.f32 %v1489, %v1842
      %v1893 = vadd.f32 %v1490, %v1847
      %v1894 = vadd.f32 %v1491, %v1852
      %v1895 = vadd.f32 %v1492, %v1857
      %v1896 = vadd.f32 %v1493, %v1862
      %v1897 = vadd.f32 %v1494, %v1867
      %v1898 = vadd.f32 %v1495, %v1872
      %v1899 = vadd.f32 %v1496, %v1877
      %v1900 = vadd.f32 %v1497, %v1882
      %1901 = vst [vmem:[#allocation5] sm:$0xff] %v1885
      %1902 = vst [vmem:[#allocation5 + $0x8] sm:$0xff] %v1886
      %1903 = vst [vmem:[#allocation5 + $0x10] sm:$0xff] %v1887
      %1904 = vst [vmem:[#allocation5 + $0x18] sm:$0xff] %v1888
      %1905 = vst [vmem:[#allocation5 + $0x20] sm:$0xff] %v1889
      %1906 = vst [vmem:[#allocation5 + $0x28] sm:$0xff] %v1890
      %1907 = vst [vmem:[#allocation5 + $0x30] sm:$0xff] %v1891
      %1908 = vst [vmem:[#allocation5 + $0x38] sm:$0xff] %v1892
      %1909 = vst [vmem:[#allocation5 + $0x40] sm:$0xff] %v1893
      %1910 = vst [vmem:[#allocation5 + $0x48] sm:$0xff] %v1894
      %1911 = vst [vmem:[#allocation5 + $0x50] sm:$0xff] %v1895
      %1912 = vst [vmem:[#allocation5 + $0x58] sm:$0xff] %v1896
      %1913 = vst [vmem:[#allocation5 + $0x60] sm:$0xff] %v1897
      %1914 = vst [vmem:[#allocation5 + $0x68] sm:$0xff] %v1898
      %1915 = vst [vmem:[#allocation5 + $0x70] sm:$0xff] %v1899
      %1916 = vst [vmem:[#allocation5 + $0x78] sm:$0xff] %v1900
      // Predicated region
      $region53: #{residual_gcn_forward.1} parent=39 // pred_check
        %p1917 = pneg %p272
      $region54: #{residual_gcn_forward.1} parent=39 // pred_check_branch
        %1919 = sbr.rel (%p1917) target = $region56
      $region55: #{residual_gcn_forward.1} parent=39 // pred_region
        %s1920 = smul.u32 %s22, 128
        %v1921 = vld [vmem:[#allocation5] sm:$0xff]
        %v1922 = vld [vmem:[#allocation5 + $0x8] sm:$0xff]
        %v1923 = vld [vmem:[#allocation5 + $0x10] sm:$0xff]
        %v1924 = vld [vmem:[#allocation5 + $0x18] sm:$0xff]
        %v1925 = vld [vmem:[#allocation5 + $0x20] sm:$0xff]
        %v1926 = vld [vmem:[#allocation5 + $0x28] sm:$0xff]
        %v1927 = vld [vmem:[#allocation5 + $0x30] sm:$0xff]
        %v1928 = vld [vmem:[#allocation5 + $0x38] sm:$0xff]
        %v1929 = vld [vmem:[#allocation5 + $0x40] sm:$0xff]
        %v1930 = vld [vmem:[#allocation5 + $0x48] sm:$0xff]
        %v1931 = vld [vmem:[#allocation5 + $0x50] sm:$0xff]
        %v1932 = vld [vmem:[#allocation5 + $0x58] sm:$0xff]
        %v1933 = vld [vmem:[#allocation5 + $0x60] sm:$0xff]
        %v1934 = vld [vmem:[#allocation5 + $0x68] sm:$0xff]
        %v1935 = vld [vmem:[#allocation5 + $0x70] sm:$0xff]
        %v1936 = vld [vmem:[#allocation5 + $0x78] sm:$0xff]
        %v1937 = vmax.f32 %v1921, 0.0
        %v1938 = vmax.f32 %v1922, 0.0
        %v1939 = vmax.f32 %v1923, 0.0
        %v1940 = vmax.f32 %v1924, 0.0
        %v1941 = vmax.f32 %v1925, 0.0
        %v1942 = vmax.f32 %v1926, 0.0
        %v1943 = vmax.f32 %v1927, 0.0
        %v1944 = vmax.f32 %v1928, 0.0
        %v1945 = vmax.f32 %v1929, 0.0
        %v1946 = vmax.f32 %v1930, 0.0
        %v1947 = vmax.f32 %v1931, 0.0
        %v1948 = vmax.f32 %v1932, 0.0
        %v1949 = vmax.f32 %v1933, 0.0
        %v1950 = vmax.f32 %v1934, 0.0
        %v1951 = vmax.f32 %v1935, 0.0
        %v1952 = vmax.f32 %v1936, 0.0
        %s1953 = scalar_lea.vmem [#allocation3], %s1920
        %v1954 = vld [vmem:[%s1953] sm:$0xff]
        %v1955 = vld [vmem:[%s1953 + $0x8] sm:$0xff]
        %v1956 = vld [vmem:[%s1953 + $0x10] sm:$0xff]
        %v1957 = vld [vmem:[%s1953 + $0x18] sm:$0xff]
        %v1958 = vld [vmem:[%s1953 + $0x20] sm:$0xff]
        %v1959 = vld [vmem:[%s1953 + $0x28] sm:$0xff]
        %v1960 = vld [vmem:[%s1953 + $0x30] sm:$0xff]
        %v1961 = vld [vmem:[%s1953 + $0x38] sm:$0xff]
        %v1962 = vld [vmem:[%s1953 + $0x40] sm:$0xff]
        %v1963 = vld [vmem:[%s1953 + $0x48] sm:$0xff]
        %v1964 = vld [vmem:[%s1953 + $0x50] sm:$0xff]
        %v1965 = vld [vmem:[%s1953 + $0x58] sm:$0xff]
        %v1966 = vld [vmem:[%s1953 + $0x60] sm:$0xff]
        %v1967 = vld [vmem:[%s1953 + $0x68] sm:$0xff]
        %v1968 = vld [vmem:[%s1953 + $0x70] sm:$0xff]
        %v1969 = vld [vmem:[%s1953 + $0x78] sm:$0xff]
        %v1970 = vadd.f32 %v1937, %v1954
        %v1971 = vadd.f32 %v1938, %v1955
        %v1972 = vadd.f32 %v1939, %v1956
        %v1973 = vadd.f32 %v1940, %v1957
        %v1974 = vadd.f32 %v1941, %v1958
        %v1975 = vadd.f32 %v1942, %v1959
        %v1976 = vadd.f32 %v1943, %v1960
        %v1977 = vadd.f32 %v1944, %v1961
        %v1978 = vadd.f32 %v1945, %v1962
        %v1979 = vadd.f32 %v1946, %v1963
        %v1980 = vadd.f32 %v1947, %v1964
        %v1981 = vadd.f32 %v1948, %v1965
        %v1982 = vadd.f32 %v1949, %v1966
        %v1983 = vadd.f32 %v1950, %v1967
        %v1984 = vadd.f32 %v1951, %v1968
        %v1985 = vadd.f32 %v1952, %v1969
        // Predicated region
        $region57: #{residual_gcn_forward.1} parent=55 // pred_check
          %p1986 = pneg %p275
        $region58: #{residual_gcn_forward.1} parent=55 // pred_check_branch
          %1988 = sbr.rel (%p1986) target = $region60
        $region59: #{residual_gcn_forward.1} parent=55 // pred_region
          %s1989 = scalar_lea.vmem [#allocation4], %s1920
          %1990 = vst [vmem:[%s1989] sm:$0xff] %v1970
          %1991 = vst [vmem:[%s1989 + $0x8] sm:$0xff] %v1971
          %1992 = vst [vmem:[%s1989 + $0x10] sm:$0xff] %v1972
          %1993 = vst [vmem:[%s1989 + $0x18] sm:$0xff] %v1973
          %1994 = vst [vmem:[%s1989 + $0x20] sm:$0xff] %v1974
          %1995 = vst [vmem:[%s1989 + $0x28] sm:$0xff] %v1975
          %1996 = vst [vmem:[%s1989 + $0x30] sm:$0xff] %v1976
          %1997 = vst [vmem:[%s1989 + $0x38] sm:$0xff] %v1977
          %1998 = vst [vmem:[%s1989 + $0x40] sm:$0xff] %v1978
          %1999 = vst [vmem:[%s1989 + $0x48] sm:$0xff] %v1979
          %2000 = vst [vmem:[%s1989 + $0x50] sm:$0xff] %v1980
          %2001 = vst [vmem:[%s1989 + $0x58] sm:$0xff] %v1981
          %2002 = vst [vmem:[%s1989 + $0x60] sm:$0xff] %v1982
          %2003 = vst [vmem:[%s1989 + $0x68] sm:$0xff] %v1983
          %2004 = vst [vmem:[%s1989 + $0x70] sm:$0xff] %v1984
          %2005 = vst [vmem:[%s1989 + $0x78] sm:$0xff] %v1985
        $region60: #{residual_gcn_forward.1} parent=55 // pred_fallthru
          _
        // Predicated region
        $region61: #{residual_gcn_forward.1} parent=55 // pred_check
          %p2006 = pneg %p862
        $region62: #{residual_gcn_forward.1} parent=55 // pred_check_branch
          %2008 = sbr.rel (%p2006) target = $region64
        $region63: #{residual_gcn_forward.1} parent=55 // pred_region
          %2009 = vst [vmem:[%s268] sm:$0xff] %v1970
          %2010 = vst [vmem:[%s268 + $0x8] sm:$0xff] %v1971
          %2011 = vst [vmem:[%s268 + $0x10] sm:$0xff] %v1972
          %2012 = vst [vmem:[%s268 + $0x18] sm:$0xff] %v1973
          %2013 = vst [vmem:[%s268 + $0x20] sm:$0xff] %v1974
          %2014 = vst [vmem:[%s268 + $0x28] sm:$0xff] %v1975
          %2015 = vst [vmem:[%s268 + $0x30] sm:$0xff] %v1976
          %2016 = vst [vmem:[%s268 + $0x38] sm:$0xff] %v1977
          %2017 = vst [vmem:[%s268 + $0x40] sm:$0xff] %v1978
          %2018 = vst [vmem:[%s268 + $0x48] sm:$0xff] %v1979
          %2019 = vst [vmem:[%s268 + $0x50] sm:$0xff] %v1980
          %2020 = vst [vmem:[%s268 + $0x58] sm:$0xff] %v1981
          %2021 = vst [vmem:[%s268 + $0x60] sm:$0xff] %v1982
          %2022 = vst [vmem:[%s268 + $0x68] sm:$0xff] %v1983
          %2023 = vst [vmem:[%s268 + $0x70] sm:$0xff] %v1984
          %2024 = vst [vmem:[%s268 + $0x78] sm:$0xff] %v1985
        $region64: #{residual_gcn_forward.1} parent=55 // pred_fallthru
          _
      $region56: #{residual_gcn_forward.1} parent=39 // pred_fallthru
        _
      %s2025 = smul.u32 %s21, %s22
      %s2026 = smul.u32 16, %s2025
      %p2027 = scmp.lt.s32.totalorder %s2026, 47
      %s2028 = scalar_select %p2027, %s2026, 47
      %s2029 = smul.addr %s2028, 8
      %s2030 = scalar_lea.vmem %s5, %s2029
      // Predicated region
      $region65: #{residual_gcn_forward.1} parent=39 // pred_check
        %p2031 = pneg %p167
      $region66: #{residual_gcn_forward.1} parent=39 // pred_check_branch
        %2033 = sbr.rel (%p2031) target = $region68
      $region67: #{residual_gcn_forward.1} parent=39 // pred_region
        %s2034 = smul.u32 %s21, %s22
        %s2035 = smul.u32 16, %s2034
      $region68: #{residual_gcn_forward.1} parent=39 // pred_fallthru
        _
    $region40: #{residual_gcn_forward.1} parent=5 // pred_fallthru
      _
    %p2036 = scmp.le.s32.totalorder 2, %s11
    // Predicated region
    $region69: #{residual_gcn_forward.1} parent=5 // pred_check
      %p2037 = pneg %p2036
    $region70: #{residual_gcn_forward.1} parent=5 // pred_check_branch
      %2039 = sbr.rel (%p2037) target = $region72
    $region71: #{residual_gcn_forward.1} parent=5 // pred_region
      %s2040 = ssub.s32 %s11, 2
      // Predicated region
      $region73: #{residual_gcn_forward.1} parent=71 // pred_check
        %p2041 = pneg %p173
      $region74: #{residual_gcn_forward.1} parent=71 // pred_check_branch
        %2043 = sbr.rel (%p2041) target = $region76
      $region75: #{residual_gcn_forward.1} parent=71 // pred_region
        %s2044 = smul.u32 %s24, %s25
        %s2045 = smul.u32 16, %s2044
        %p2046 = scmp.lt.s32.totalorder %s2045, 47
        %s2047 = scalar_select %p2046, %s2045, 47
        %s2048 = smul.addr %s2047, 8
        %s2049 = scalar_lea.vmem %s5, %s2048
      $region76: #{residual_gcn_forward.1} parent=71 // pred_fallthru
        _
    $region72: #{residual_gcn_forward.1} parent=5 // pred_fallthru
      _
  $region6: #{residual_gcn_forward.1} parent=0 // loop_footer
    %s15 = sadd.s32 1, %s11
  $region7: #{residual_gcn_forward.1} parent=0 // loop_footer_branch
    %10 = sbr.rel target = $region3
  $region8: #{residual_gcn_forward.1} parent=0 // loop_exit
    _

</llo_original>
